<compile_context>
chip_gen: v7x
topology: tpu7x:2x2x1
jax: 0.10.0
libtpu: 0.0.40
codegen_flags: <defaults>
</compile_context>

<pallas_src>
import functools

import jax
import jax.numpy as jnp
from jax import lax
from jax.experimental import pallas as pl
from jax.experimental.pallas import tpu as pltpu


def _dynconv2d_kernel(x_ref, mask_ref,
                      w1_ref, b1_ref,
                      wp_ref, bp_ref,
                      eh_ref,
                      w2a_ref, w2b_ref, b2_ref,
                      o_ref,
                      xpad_ref, *,
                      T, C, H, K, use_kernel_mask, compute_dtype):
    cd = compute_dtype
    pad = K // 2            # feature-conv padding
    pad2 = (K - 1) // 2     # time-band left offset (== pad for odd K)

    x = x_ref[0]                                                     # (T, C)

    # ---- linear1 + GLU (elementwise math in f32) ------------------------
    h1 = jnp.dot(x.astype(cd), w1_ref[...],
                 preferred_element_type=jnp.float32) + b1_ref[...]   # (T, 2C) f32
    xg = h1[:, :C] * jax.nn.sigmoid(h1[:, C:])                       # (T, C)  f32

    # ---- zero-padded copy of xg in VMEM: xpad[pad2 + t, pad + c] = xg[t, c]
    # Border strips are re-zeroed every step (cheap; avoids relying on a
    # first-iteration init that would not hold on the second megacore core).
    if pad2 > 0:
        zr = jnp.zeros((pad2, C + 2 * pad), jnp.float32)
        xpad_ref[pl.ds(0, pad2), :] = zr
        xpad_ref[pl.ds(pad2 + T, pad2), :] = zr
    if pad > 0:
        zc = jnp.zeros((T + 2 * pad2, pad), jnp.float32)
        xpad_ref[:, pl.ds(0, pad)] = zc
        xpad_ref[:, pl.ds(C + pad, pad)] = zc
    xpad_ref[pl.ds(pad2, T), pl.ds(pad, C)] = xg

    # ---- fused dynamic-kernel projection (one lane-padded matmul) --------
    #   columns [0, K)        : frequency kernel wf, tap j at column j
    #   column  K + j*H + h   : time-kernel weight, tap j / head h
    proj = jnp.dot(xg.astype(cd), wp_ref[...],
                   preferred_element_type=jnp.float32) + bp_ref[...]  # (T, P) f32

    # ---- band softmax over the K taps (per head); no (T, T) tensors ------
    # Causal mask (use_kernel_mask) keeps only taps j <= pad2 (i.e. s <= t).
    taps = tuple(range(pad2 + 1)) if use_kernel_mask else tuple(range(K))
    w_j = [proj[:, K + j * H:K + (j + 1) * H] for j in taps]          # (T, H) each
    m = w_j[0]
    for s in w_j[1:]:
        m = jnp.maximum(m, s)
    t_col = lax.broadcasted_iota(jnp.int32, (T, 1), 0)
    e_j = []
    denom = jnp.zeros((T, H), jnp.float32)
    for idx, j in enumerate(taps):
        e = jnp.exp(w_j[idx] - m)
        if j != pad2:  # zero taps whose source row t + j - pad2 falls outside [0, T)
            valid = jnp.logical_and(t_col >= (pad2 - j), t_col < (T + pad2 - j))
            e = e * valid.astype(jnp.float32)
        e_j.append(e)
        denom = denom + e
    # The diagonal tap (j == pad2) is always valid, so denom > 0 and the softmax
    # row can never be fully masked.  Approx reciprocal runs on the EUP slot.
    inv = pl.reciprocal(denom, approx=True)                           # (T, H)

    # ---- both dynamic convolutions as K shifted FMAs on (T, C) -----------
    eh = eh_ref[...]                                                  # (H, C) head->feature expand
    out_t = jnp.zeros((T, C), jnp.float32)
    for idx, j in enumerate(taps):
        p = jnp.dot(e_j[idx] * inv, eh,
                    preferred_element_type=jnp.float32)               # (T, C)
        out_t = out_t + p * xpad_ref[pl.ds(j, T), pl.ds(pad, C)]
    xf = jnp.zeros((T, C), jnp.float32)
    for j in range(K):
        xf = xf + proj[:, j:j + 1] * xpad_ref[pl.ds(pad2, T), pl.ds(j, C)]

    # ---- padding mask (0/1 column multiply) + split linear2 (no concat) ---
    mcol = mask_ref[0]                                                # (T, 1) f32 {0,1}
    out_t = out_t * mcol
    xf = xf * mcol
    out = (jnp.dot(out_t.astype(cd), w2a_ref[...], preferred_element_type=jnp.float32)
           + jnp.dot(xf.astype(cd), w2b_ref[...], preferred_element_type=jnp.float32)
           + b2_ref[...])
    o_ref[0] = out.astype(o_ref.dtype)


def dynamic_convolution_2d(query, mask, params, *, wshare, kernel_size,
                           use_kernel_mask=False, compute_dtype=jnp.float32):
    """Forward pass. query: (B, T, C) f32; mask: (B, 1, T) (1 = keep) or None."""
    B, T, C = query.shape
    H, K = wshare, kernel_size
    assert C % H == 0 and K % 2 == 1
    dk = C // H
    pad = K // 2
    pad2 = (K - 1) // 2
    cd = compute_dtype

    # ---- host-side, one-time weight prep (pre-transpose / fuse / pad) ----
    w1t = jnp.asarray(params["w1"]).T.astype(cd)                     # (C, 2C)
    b1 = jnp.asarray(params["b1"]).astype(jnp.float32)               # (1, 2C)

    wfw = jnp.asarray(params["wf_w"])                                # (K, C)
    wfb = jnp.asarray(params["wf_b"])[0]                             # (K,)
    www = jnp.asarray(params["ww_w"])                                # (H*K, C)
    wwb = jnp.asarray(params["ww_b"])[0]                             # (H*K,)
    # reorder time-kernel rows j-major: row j*H + h <- original row h*K + j
    www_jm = www.reshape(H, K, C).transpose(1, 0, 2).reshape(H * K, C)
    wwb_jm = wwb.reshape(H, K).transpose(1, 0).reshape(H * K)
    n_proj = K * (H + 1)
    P = ((n_proj + 127) // 128) * 128                                # lane-pad fused output
    wp = jnp.zeros((P, C), jnp.float32).at[:K].set(wfw).at[K:K + H * K].set(www_jm)
    bp = jnp.zeros((P,), jnp.float32).at[:K].set(wfb).at[K:K + H * K].set(wwb_jm)
    wpt = wp.T.astype(cd)                                            # (C, P)
    bp = bp.reshape(1, P)                                            # f32

    # split linear2: first C input features = time branch, last C = freq branch
    w2 = jnp.asarray(params["w2"])                                   # (C, 2C)
    w2at = w2[:, :C].T.astype(cd)                                    # (C, C)
    w2bt = w2[:, C:].T.astype(cd)                                    # (C, C)
    b2 = jnp.asarray(params["b2"]).astype(jnp.float32)               # (1, C)

    # head -> feature one-hot expansion: eh[h, c] = 1 iff c // dk == h
    eh = (jnp.arange(C)[None, :] // dk == jnp.arange(H)[:, None]).astype(jnp.float32)

    # padding mask as a thin (B, T, 1) 0/1 column
    if (mask is not None) and (not use_kernel_mask):
        mask_col = jnp.swapaxes(mask, -1, -2).astype(jnp.float32).reshape(B, T, 1)
    else:
        mask_col = jnp.ones((B, T, 1), jnp.float32)

    kern = functools.partial(_dynconv2d_kernel, T=T, C=C, H=H, K=K,
                             use_kernel_mask=use_kernel_mask, compute_dtype=cd)

    def fullspec(a):
        nd = a.ndim
        return pl.BlockSpec(a.shape, lambda b, nd=nd: (0,) * nd)

    itemsize = query.dtype.itemsize
    flops = (2 * B * T * (C * 2 * C + C * P + 2 * C * C)   # MXU matmuls
             + 2 * B * T * H * C * K                       # head-expansion matmuls
             + 4 * B * T * C * K)                          # shifted FMAs (both branches)
    transcendentals = B * T * (C + H * K + H)              # sigmoid + exp + reciprocal
    bytes_accessed = (query.size * itemsize + B * T * 4 + B * T * C * itemsize
                      + sum(a.size * a.dtype.itemsize
                            for a in (w1t, b1, wpt, bp, eh, w2at, w2bt, b2)))

    return pl.pallas_call(
        kern,
        out_shape=jax.ShapeDtypeStruct((B, T, C), query.dtype),
        grid=(B,),
        in_specs=[
            pl.BlockSpec((1, T, C), lambda b: (b, 0, 0)),
            pl.BlockSpec((1, T, 1), lambda b: (b, 0, 0)),
            fullspec(w1t), fullspec(b1),
            fullspec(wpt), fullspec(bp),
            fullspec(eh),
            fullspec(w2at), fullspec(w2bt), fullspec(b2),
        ],
        out_specs=pl.BlockSpec((1, T, C), lambda b: (b, 0, 0)),
        scratch_shapes=[pltpu.VMEM((T + 2 * pad2, C + 2 * pad), jnp.float32)],
        compiler_params=pltpu.CompilerParams(
            dimension_semantics=("parallel",),
            vmem_limit_bytes=64 * 1024 * 1024),
        cost_estimate=pl.CostEstimate(flops=flops,
                                      transcendentals=transcendentals,
                                      bytes_accessed=bytes_accessed),
    )(query, mask_col, w1t, b1, wpt, bp, eh, w2at, w2bt, b2)


def init_params(key, n_feat, wshare, kernel_size):
    """Deterministic synthetic parameters matching the module's layer shapes."""
    C, H, K = n_feat, wshare, kernel_size
    ks = jax.random.split(key, 8)

    def lin(kw, kb, out_d, in_d):
        scale = 1.0 / (in_d ** 0.5)
        w = jax.random.normal(kw, (out_d, in_d), jnp.float32) * scale
        b = jax.random.normal(kb, (1, out_d), jnp.float32) * 0.01
        return w, b

    w1, b1 = lin(ks[0], ks[1], 2 * C, C)        # linear1
    wfw, wfb = lin(ks[2], ks[3], K, C)          # linear_weight_f
    www, wwb = lin(ks[4], ks[5], H * K, C)      # linear_weight
    w2, b2 = lin(ks[6], ks[7], C, 2 * C)        # linear2
    return dict(w1=w1, b1=b1, wf_w=wfw, wf_b=wfb, ww_w=www, ww_b=wwb, w2=w2, b2=b2)


def reference_forward(query, mask, params, *, wshare, kernel_size,
                      use_kernel_mask=False):
    """Plain-JAX mirror of the PyTorch forward (for validation)."""
    B, T, C = query.shape
    H, K = wshare, kernel_size
    dk = C // H
    pad = K // 2
    pad2 = (K - 1) // 2
    hp = jax.lax.Precision.HIGHEST
    w1, b1 = params["w1"], params["b1"][0]
    wfw, wfb = params["wf_w"], params["wf_b"][0]
    www, wwb = params["ww_w"], params["ww_b"][0]
    w2, b2 = params["w2"], params["b2"][0]

    h1 = jnp.einsum("btc,dc->btd", query, w1, precision=hp) + b1
    xg = h1[..., :C] * jax.nn.sigmoid(h1[..., C:])

    wf = jnp.einsum("btc,kc->btk", xg, wfw, precision=hp) + wfb
    xg_pad = jnp.pad(xg, ((0, 0), (0, 0), (pad, pad)))
    xf = jnp.zeros_like(xg)
    for j in range(K):
        xf = xf + xg_pad[..., j:j + C] * wf[..., j:j + 1]

    wt = jnp.einsum("btc,kc->btk", xg, www, precision=hp) + wwb          # (B,T,H*K)
    wt = wt.reshape(B, T, H, K).transpose(0, 2, 1, 3)                    # (B,H,T,K)

    t_idx = jnp.arange(T)[:, None]
    s_idx = jnp.arange(T)[None, :]
    off = s_idx - t_idx
    band = (off >= -pad2) & (off <= K - 1 - pad2)
    if use_kernel_mask:
        band = band & (s_idx <= t_idx)
    score = jnp.zeros((B, H, T, T), jnp.float32)
    for j in range(K):
        score = score + jnp.where(off == (j - pad2), wt[..., j:j + 1], 0.0)
    score = jnp.where(band, score, -jnp.inf)
    attn = jax.nn.softmax(score, axis=-1)                                # (B,H,T,T)

    xg_h = xg.reshape(B, T, H, dk).transpose(0, 2, 1, 3)                 # (B,H,T,dk)
    out_h = jnp.einsum("bhts,bhsd->bhtd", attn, xg_h, precision=hp)
    out_t = out_h.transpose(0, 2, 1, 3).reshape(B, T, C)

    y = jnp.concatenate([out_t, xf], axis=-1)
    if (mask is not None) and (not use_kernel_mask):
        m = jnp.swapaxes(mask, -1, -2)                                   # (B,T,1)
        y = jnp.where(m == 0, 0.0, y)
    return jnp.einsum("btd,cd->btc", y, w2, precision=hp) + b2


if __name__ == "__main__":
    B, T, C = 2, 8, 32          # batch, time1, d_model (n_feat)
    H, K = 4, 5                 # wshare, kernel_size
    # dropout_rate = 0.0 (inference no-op), use_bias=False

    key = jax.random.PRNGKey(0)
    kq, kp = jax.random.split(key, 2)
    query = jax.random.normal(kq, (B, T, C), jnp.float32)
    params = init_params(kp, C, H, K)

    # mask: (B, 1, T), 1 = keep.  Second batch element has 2 padded frames.
    lens = jnp.array([T, T - 2])
    mask = (jnp.arange(T)[None, None, :] < lens[:, None, None]).astype(jnp.float32)

    # --- f32 MXU path, with padding mask --------------------------------
    out = dynamic_convolution_2d(query, mask, params, wshare=H, kernel_size=K,
                                 use_kernel_mask=False)
    out = jax.block_until_ready(out)
    assert out.shape == (B, T, C)
    ref = reference_forward(query, mask, params, wshare=H, kernel_size=K,
                            use_kernel_mask=False)
    assert jnp.allclose(out, ref, rtol=1e-2, atol=1e-2), "f32 mismatch vs reference"

    # --- causal kernel-mask path (padding mask unused, as in the module) --
    out_c = dynamic_convolution_2d(query, mask, params, wshare=H, kernel_size=K,
                                   use_kernel_mask=True)
    out_c = jax.block_until_ready(out_c)
    ref_c = reference_forward(query, mask, params, wshare=H, kernel_size=K,
                              use_kernel_mask=True)
    assert jnp.allclose(out_c, ref_c, rtol=1e-2, atol=1e-2), "causal mismatch vs reference"

    # --- bf16 MXU path (v6e / v7x style), elementwise math kept in f32 ----
    out_bf = dynamic_convolution_2d(query, mask, params, wshare=H, kernel_size=K,
                                    use_kernel_mask=False, compute_dtype=jnp.bfloat16)
    out_bf = jax.block_until_ready(out_bf)
    assert jnp.allclose(out_bf, ref, rtol=5e-2, atol=5e-2), "bf16 mismatch vs reference"

    print("KERNEL_OK")
</pallas_src>

<mosaic_0001>
module attributes {stable_mosaic.version = 11 : i64} {
  func.func @_dynconv2d_kernel(%arg0: i32, %arg1: memref<1x8x32xf32, #tpu.memory_space<vmem>>, %arg2: memref<1x8x1xf32, #tpu.memory_space<vmem>>, %arg3: memref<32x64xf32, #tpu.memory_space<vmem>>, %arg4: memref<1x64xf32, #tpu.memory_space<vmem>>, %arg5: memref<32x128xf32, #tpu.memory_space<vmem>>, %arg6: memref<1x128xf32, #tpu.memory_space<vmem>>, %arg7: memref<4x32xf32, #tpu.memory_space<vmem>>, %arg8: memref<32x32xf32, #tpu.memory_space<vmem>>, %arg9: memref<32x32xf32, #tpu.memory_space<vmem>>, %arg10: memref<1x32xf32, #tpu.memory_space<vmem>>, %arg11: memref<1x8x32xf32, #tpu.memory_space<vmem>>, %arg12: memref<12x36xf32, #tpu.memory_space<vmem>>) attributes {dimension_semantics = [#tpu.dimension_semantics<parallel>], iteration_bounds = array<i64: 2>, scalar_prefetch = 0 : i64, scratch_operands = 1 : i64, tpu.core_type = #tpu.core_type<tc>, window_params = [{transform_indices = @transform_0, window_bounds = array<i64: 1, 8, 32>}, {transform_indices = @transform_1, window_bounds = array<i64: 1, 8, 1>}, {pipeline_mode = #tpu.pipeline_mode<synchronous>, transform_indices = @transform_2, window_bounds = array<i64: 32, 64>}, {pipeline_mode = #tpu.pipeline_mode<synchronous>, transform_indices = @transform_3, window_bounds = array<i64: 1, 64>}, {pipeline_mode = #tpu.pipeline_mode<synchronous>, transform_indices = @transform_4, window_bounds = array<i64: 32, 128>}, {pipeline_mode = #tpu.pipeline_mode<synchronous>, transform_indices = @transform_5, window_bounds = array<i64: 1, 128>}, {pipeline_mode = #tpu.pipeline_mode<synchronous>, transform_indices = @transform_6, window_bounds = array<i64: 4, 32>}, {pipeline_mode = #tpu.pipeline_mode<synchronous>, transform_indices = @transform_7, window_bounds = array<i64: 32, 32>}, {pipeline_mode = #tpu.pipeline_mode<synchronous>, transform_indices = @transform_8, window_bounds = array<i64: 32, 32>}, {pipeline_mode = #tpu.pipeline_mode<synchronous>, transform_indices = @transform_9, window_bounds = array<i64: 1, 32>}, {transform_indices = @transform_10, window_bounds = array<i64: 1, 8, 32>}]} {
    %c0 = arith.constant 0 : index
    %c0_0 = arith.constant 0 : index
    %c0_1 = arith.constant 0 : index
    %0 = vector.load %arg1[%c0, %c0_0, %c0_1] : memref<1x8x32xf32, #tpu.memory_space<vmem>>, vector<1x8x32xf32>
    %1 = vector.shape_cast %0 : vector<1x8x32xf32> to vector<8x32xf32>
    %c0_2 = arith.constant 0 : index
    %c0_3 = arith.constant 0 : index
    %2 = vector.load %arg3[%c0_2, %c0_3] : memref<32x64xf32, #tpu.memory_space<vmem>>, vector<32x64xf32>
    %cst = arith.constant dense<0.000000e+00> : vector<8x64xf32>
    %3 = tpu.matmul %1, %2, %cst {dimension_numbers = #tpu.dot_dimension_numbers<[1], [0], [0], [1], [0, 0, 1, 1], [], []>} : vector<8x32xf32>, vector<32x64xf32>, vector<8x64xf32> -> vector<8x64xf32>
    %c0_4 = arith.constant 0 : index
    %c0_5 = arith.constant 0 : index
    %4 = vector.load %arg4[%c0_4, %c0_5] : memref<1x64xf32, #tpu.memory_space<vmem>>, vector<1x64xf32>
    %5 = vector.broadcast %4 : vector<1x64xf32> to vector<8x64xf32>
    %6 = arith.addf %3, %5 : vector<8x64xf32>
    %7 = vector.extract_strided_slice %6 {offsets = [0, 0], sizes = [8, 32], strides = [1, 1]} : vector<8x64xf32> to vector<8x32xf32>
    %8 = vector.extract_strided_slice %6 {offsets = [0, 32], sizes = [8, 32], strides = [1, 1]} : vector<8x64xf32> to vector<8x32xf32>
    %9 = arith.negf %8 : vector<8x32xf32>
    %10 = math.exp %9 : vector<8x32xf32>
    %cst_6 = arith.constant 1.000000e+00 : f32
    %11 = vector.broadcast %cst_6 : f32 to vector<8x32xf32>
    %12 = arith.addf %11, %10 : vector<8x32xf32>
    %13 = arith.divf %11, %12 : vector<8x32xf32>
    %14 = arith.mulf %7, %13 : vector<8x32xf32>
    %cst_7 = arith.constant 0.000000e+00 : f32
    %15 = vector.broadcast %cst_7 : f32 to vector<2x36xf32>
    %c0_8 = arith.constant 0 : index
    %c0_9 = arith.constant 0 : index
    %16 = vector.load %arg12[%c0_8, %c0_9] : memref<12x36xf32, #tpu.memory_space<vmem>>, vector<2x36xf32>
    tpu.vector_store %arg12[%c0_8, %c0_9], %15 {strides = array<i32>} : memref<12x36xf32, #tpu.memory_space<vmem>>, vector<2x36xf32>,
    %c10 = arith.constant 10 : index
    %c0_10 = arith.constant 0 : index
    %17 = vector.load %arg12[%c10, %c0_10] : memref<12x36xf32, #tpu.memory_space<vmem>>, vector<2x36xf32>
    tpu.vector_store %arg12[%c10, %c0_10], %15 {strides = array<i32>} : memref<12x36xf32, #tpu.memory_space<vmem>>, vector<2x36xf32>,
    %cst_11 = arith.constant 0.000000e+00 : f32
    %18 = vector.broadcast %cst_11 : f32 to vector<12x2xf32>
    %c0_12 = arith.constant 0 : index
    %c0_13 = arith.constant 0 : index
    %19 = vector.load %arg12[%c0_12, %c0_13] : memref<12x36xf32, #tpu.memory_space<vmem>>, vector<12x2xf32>
    tpu.vector_store %arg12[%c0_12, %c0_13], %18 {strides = array<i32>} : memref<12x36xf32, #tpu.memory_space<vmem>>, vector<12x2xf32>,
    %c0_14 = arith.constant 0 : index
    %c34 = arith.constant 34 : index
    %20 = vector.load %arg12[%c0_14, %c34] : memref<12x36xf32, #tpu.memory_space<vmem>>, vector<12x2xf32>
    tpu.vector_store %arg12[%c0_14, %c34], %18 {strides = array<i32>} : memref<12x36xf32, #tpu.memory_space<vmem>>, vector<12x2xf32>,
    %c2 = arith.constant 2 : index
    %c2_15 = arith.constant 2 : index
    %21 = vector.load %arg12[%c2, %c2_15] : memref<12x36xf32, #tpu.memory_space<vmem>>, vector<8x32xf32>
    tpu.vector_store %arg12[%c2, %c2_15], %14 {strides = array<i32>} : memref<12x36xf32, #tpu.memory_space<vmem>>, vector<8x32xf32>,
    %c0_16 = arith.constant 0 : index
    %c0_17 = arith.constant 0 : index
    %22 = vector.load %arg5[%c0_16, %c0_17] : memref<32x128xf32, #tpu.memory_space<vmem>>, vector<32x128xf32>
    %cst_18 = arith.constant dense<0.000000e+00> : vector<8x128xf32>
    %23 = tpu.matmul %14, %22, %cst_18 {dimension_numbers = #tpu.dot_dimension_numbers<[1], [0], [0], [1], [0, 0, 1, 1], [], []>} : vector<8x32xf32>, vector<32x128xf32>, vector<8x128xf32> -> vector<8x128xf32>
    %c0_19 = arith.constant 0 : index
    %c0_20 = arith.constant 0 : index
    %24 = vector.load %arg6[%c0_19, %c0_20] : memref<1x128xf32, #tpu.memory_space<vmem>>, vector<1x128xf32>
    %25 = vector.broadcast %24 : vector<1x128xf32> to vector<8x128xf32>
    %26 = arith.addf %23, %25 : vector<8x128xf32>
    %27 = vector.extract_strided_slice %26 {offsets = [0, 5], sizes = [8, 4], strides = [1, 1]} : vector<8x128xf32> to vector<8x4xf32>
    %28 = vector.extract_strided_slice %26 {offsets = [0, 9], sizes = [8, 4], strides = [1, 1]} : vector<8x128xf32> to vector<8x4xf32>
    %29 = vector.extract_strided_slice %26 {offsets = [0, 13], sizes = [8, 4], strides = [1, 1]} : vector<8x128xf32> to vector<8x4xf32>
    %30 = vector.extract_strided_slice %26 {offsets = [0, 17], sizes = [8, 4], strides = [1, 1]} : vector<8x128xf32> to vector<8x4xf32>
    %31 = vector.extract_strided_slice %26 {offsets = [0, 21], sizes = [8, 4], strides = [1, 1]} : vector<8x128xf32> to vector<8x4xf32>
    %32 = arith.maximumf %27, %28 : vector<8x4xf32>
    %33 = arith.maximumf %32, %29 : vector<8x4xf32>
    %34 = arith.maximumf %33, %30 : vector<8x4xf32>
    %35 = arith.maximumf %34, %31 : vector<8x4xf32>
    %36 = tpu.iota {dimensions = array<i32: 0>} : vector<8x1xi32>
    %cst_21 = arith.constant 0.000000e+00 : f32
    %37 = vector.broadcast %cst_21 : f32 to vector<8x4xf32>
    %38 = arith.subf %27, %35 : vector<8x4xf32>
    %39 = math.exp %38 : vector<8x4xf32>
    %c2_i32 = arith.constant 2 : i32
    %40 = vector.broadcast %c2_i32 : i32 to vector<8x1xi32>
    %41 = arith.cmpi sge, %36, %40 : vector<8x1xi32>
    %c10_i32 = arith.constant 10 : i32
    %42 = vector.broadcast %c10_i32 : i32 to vector<8x1xi32>
    %43 = arith.cmpi slt, %36, %42 : vector<8x1xi32>
    %44 = arith.andi %41, %43 : vector<8x1xi1>
    %45 = arith.extui %44 : vector<8x1xi1> to vector<8x1xi32>
    %46 = arith.sitofp %45 : vector<8x1xi32> to vector<8x1xf32>
    %47 = vector.broadcast %46 : vector<8x1xf32> to vector<8x4xf32>
    %48 = arith.mulf %39, %47 : vector<8x4xf32>
    %49 = arith.addf %37, %48 : vector<8x4xf32>
    %50 = arith.subf %28, %35 : vector<8x4xf32>
    %51 = math.exp %50 : vector<8x4xf32>
    %c1_i32 = arith.constant 1 : i32
    %52 = vector.broadcast %c1_i32 : i32 to vector<8x1xi32>
    %53 = arith.cmpi sge, %36, %52 : vector<8x1xi32>
    %c9_i32 = arith.constant 9 : i32
    %54 = vector.broadcast %c9_i32 : i32 to vector<8x1xi32>
    %55 = arith.cmpi slt, %36, %54 : vector<8x1xi32>
    %56 = arith.andi %53, %55 : vector<8x1xi1>
    %57 = arith.extui %56 : vector<8x1xi1> to vector<8x1xi32>
    %58 = arith.sitofp %57 : vector<8x1xi32> to vector<8x1xf32>
    %59 = vector.broadcast %58 : vector<8x1xf32> to vector<8x4xf32>
    %60 = arith.mulf %51, %59 : vector<8x4xf32>
    %61 = arith.addf %49, %60 : vector<8x4xf32>
    %62 = arith.subf %29, %35 : vector<8x4xf32>
    %63 = math.exp %62 : vector<8x4xf32>
    %64 = arith.addf %61, %63 : vector<8x4xf32>
    %65 = arith.subf %30, %35 : vector<8x4xf32>
    %66 = math.exp %65 : vector<8x4xf32>
    %c-1_i32 = arith.constant -1 : i32
    %67 = vector.broadcast %c-1_i32 : i32 to vector<8x1xi32>
    %68 = arith.cmpi sge, %36, %67 : vector<8x1xi32>
    %c7_i32 = arith.constant 7 : i32
    %69 = vector.broadcast %c7_i32 : i32 to vector<8x1xi32>
    %70 = arith.cmpi slt, %36, %69 : vector<8x1xi32>
    %71 = arith.andi %68, %70 : vector<8x1xi1>
    %72 = arith.extui %71 : vector<8x1xi1> to vector<8x1xi32>
    %73 = arith.sitofp %72 : vector<8x1xi32> to vector<8x1xf32>
    %74 = vector.broadcast %73 : vector<8x1xf32> to vector<8x4xf32>
    %75 = arith.mulf %66, %74 : vector<8x4xf32>
    %76 = arith.addf %64, %75 : vector<8x4xf32>
    %77 = arith.subf %31, %35 : vector<8x4xf32>
    %78 = math.exp %77 : vector<8x4xf32>
    %c-2_i32 = arith.constant -2 : i32
    %79 = vector.broadcast %c-2_i32 : i32 to vector<8x1xi32>
    %80 = arith.cmpi sge, %36, %79 : vector<8x1xi32>
    %c6_i32 = arith.constant 6 : i32
    %81 = vector.broadcast %c6_i32 : i32 to vector<8x1xi32>
    %82 = arith.cmpi slt, %36, %81 : vector<8x1xi32>
    %83 = arith.andi %80, %82 : vector<8x1xi1>
    %84 = arith.extui %83 : vector<8x1xi1> to vector<8x1xi32>
    %85 = arith.sitofp %84 : vector<8x1xi32> to vector<8x1xf32>
    %86 = vector.broadcast %85 : vector<8x1xf32> to vector<8x4xf32>
    %87 = arith.mulf %78, %86 : vector<8x4xf32>
    %88 = arith.addf %76, %87 : vector<8x4xf32>
    %89 = tpu.reciprocal %88 {approx = true} : vector<8x4xf32> -> vector<8x4xf32>
    %c0_22 = arith.constant 0 : index
    %c0_23 = arith.constant 0 : index
    %90 = vector.load %arg7[%c0_22, %c0_23] : memref<4x32xf32, #tpu.memory_space<vmem>>, vector<4x32xf32>
    %cst_24 = arith.constant 0.000000e+00 : f32
    %91 = vector.broadcast %cst_24 : f32 to vector<8x32xf32>
    %92 = arith.mulf %48, %89 : vector<8x4xf32>
    %cst_25 = arith.constant dense<0.000000e+00> : vector<8x32xf32>
    %93 = tpu.matmul %92, %90, %cst_25 {dimension_numbers = #tpu.dot_dimension_numbers<[1], [0], [0], [1], [0, 0, 1, 1], [], []>} : vector<8x4xf32>, vector<4x32xf32>, vector<8x32xf32> -> vector<8x32xf32>
    %c0_26 = arith.constant 0 : index
    %c2_27 = arith.constant 2 : index
    %94 = vector.load %arg12[%c0_26, %c2_27] : memref<12x36xf32, #tpu.memory_space<vmem>>, vector<8x32xf32>
    %95 = arith.mulf %93, %94 : vector<8x32xf32>
    %96 = arith.addf %91, %95 : vector<8x32xf32>
    %97 = arith.mulf %60, %89 : vector<8x4xf32>
    %cst_28 = arith.constant dense<0.000000e+00> : vector<8x32xf32>
    %98 = tpu.matmul %97, %90, %cst_28 {dimension_numbers = #tpu.dot_dimension_numbers<[1], [0], [0], [1], [0, 0, 1, 1], [], []>} : vector<8x4xf32>, vector<4x32xf32>, vector<8x32xf32> -> vector<8x32xf32>
    %c1 = arith.constant 1 : index
    %c2_29 = arith.constant 2 : index
    %99 = vector.load %arg12[%c1, %c2_29] : memref<12x36xf32, #tpu.memory_space<vmem>>, vector<8x32xf32>
    %100 = arith.mulf %98, %99 : vector<8x32xf32>
    %101 = arith.addf %96, %100 : vector<8x32xf32>
    %102 = arith.mulf %63, %89 : vector<8x4xf32>
    %cst_30 = arith.constant dense<0.000000e+00> : vector<8x32xf32>
    %103 = tpu.matmul %102, %90, %cst_30 {dimension_numbers = #tpu.dot_dimension_numbers<[1], [0], [0], [1], [0, 0, 1, 1], [], []>} : vector<8x4xf32>, vector<4x32xf32>, vector<8x32xf32> -> vector<8x32xf32>
    %c2_31 = arith.constant 2 : index
    %c2_32 = arith.constant 2 : index
    %104 = vector.load %arg12[%c2_31, %c2_32] : memref<12x36xf32, #tpu.memory_space<vmem>>, vector<8x32xf32>
    %105 = arith.mulf %103, %104 : vector<8x32xf32>
    %106 = arith.addf %101, %105 : vector<8x32xf32>
    %107 = arith.mulf %75, %89 : vector<8x4xf32>
    %cst_33 = arith.constant dense<0.000000e+00> : vector<8x32xf32>
    %108 = tpu.matmul %107, %90, %cst_33 {dimension_numbers = #tpu.dot_dimension_numbers<[1], [0], [0], [1], [0, 0, 1, 1], [], []>} : vector<8x4xf32>, vector<4x32xf32>, vector<8x32xf32> -> vector<8x32xf32>
    %c3 = arith.constant 3 : index
    %c2_34 = arith.constant 2 : index
    %109 = vector.load %arg12[%c3, %c2_34] : memref<12x36xf32, #tpu.memory_space<vmem>>, vector<8x32xf32>
    %110 = arith.mulf %108, %109 : vector<8x32xf32>
    %111 = arith.addf %106, %110 : vector<8x32xf32>
    %112 = arith.mulf %87, %89 : vector<8x4xf32>
    %cst_35 = arith.constant dense<0.000000e+00> : vector<8x32xf32>
    %113 = tpu.matmul %112, %90, %cst_35 {dimension_numbers = #tpu.dot_dimension_numbers<[1], [0], [0], [1], [0, 0, 1, 1], [], []>} : vector<8x4xf32>, vector<4x32xf32>, vector<8x32xf32> -> vector<8x32xf32>
    %c4 = arith.constant 4 : index
    %c2_36 = arith.constant 2 : index
    %114 = vector.load %arg12[%c4, %c2_36] : memref<12x36xf32, #tpu.memory_space<vmem>>, vector<8x32xf32>
    %115 = arith.mulf %113, %114 : vector<8x32xf32>
    %116 = arith.addf %111, %115 : vector<8x32xf32>
    %cst_37 = arith.constant 0.000000e+00 : f32
    %117 = vector.broadcast %cst_37 : f32 to vector<8x32xf32>
    %118 = vector.extract_strided_slice %26 {offsets = [0, 0], sizes = [8, 1], strides = [1, 1]} : vector<8x128xf32> to vector<8x1xf32>
    %c2_38 = arith.constant 2 : index
    %c0_39 = arith.constant 0 : index
    %119 = vector.load %arg12[%c2_38, %c0_39] : memref<12x36xf32, #tpu.memory_space<vmem>>, vector<8x32xf32>
    %120 = vector.broadcast %118 : vector<8x1xf32> to vector<8x32xf32>
    %121 = arith.mulf %120, %119 : vector<8x32xf32>
    %122 = arith.addf %117, %121 : vector<8x32xf32>
    %123 = vector.extract_strided_slice %26 {offsets = [0, 1], sizes = [8, 1], strides = [1, 1]} : vector<8x128xf32> to vector<8x1xf32>
    %c2_40 = arith.constant 2 : index
    %c1_41 = arith.constant 1 : index
    %124 = vector.load %arg12[%c2_40, %c1_41] : memref<12x36xf32, #tpu.memory_space<vmem>>, vector<8x32xf32>
    %125 = vector.broadcast %123 : vector<8x1xf32> to vector<8x32xf32>
    %126 = arith.mulf %125, %124 : vector<8x32xf32>
    %127 = arith.addf %122, %126 : vector<8x32xf32>
    %128 = vector.extract_strided_slice %26 {offsets = [0, 2], sizes = [8, 1], strides = [1, 1]} : vector<8x128xf32> to vector<8x1xf32>
    %c2_42 = arith.constant 2 : index
    %c2_43 = arith.constant 2 : index
    %129 = vector.load %arg12[%c2_42, %c2_43] : memref<12x36xf32, #tpu.memory_space<vmem>>, vector<8x32xf32>
    %130 = vector.broadcast %128 : vector<8x1xf32> to vector<8x32xf32>
    %131 = arith.mulf %130, %129 : vector<8x32xf32>
    %132 = arith.addf %127, %131 : vector<8x32xf32>
    %133 = vector.extract_strided_slice %26 {offsets = [0, 3], sizes = [8, 1], strides = [1, 1]} : vector<8x128xf32> to vector<8x1xf32>
    %c2_44 = arith.constant 2 : index
    %c3_45 = arith.constant 3 : index
    %134 = vector.load %arg12[%c2_44, %c3_45] : memref<12x36xf32, #tpu.memory_space<vmem>>, vector<8x32xf32>
    %135 = vector.broadcast %133 : vector<8x1xf32> to vector<8x32xf32>
    %136 = arith.mulf %135, %134 : vector<8x32xf32>
    %137 = arith.addf %132, %136 : vector<8x32xf32>
    %138 = vector.extract_strided_slice %26 {offsets = [0, 4], sizes = [8, 1], strides = [1, 1]} : vector<8x128xf32> to vector<8x1xf32>
    %c2_46 = arith.constant 2 : index
    %c4_47 = arith.constant 4 : index
    %139 = vector.load %arg12[%c2_46, %c4_47] : memref<12x36xf32, #tpu.memory_space<vmem>>, vector<8x32xf32>
    %140 = vector.broadcast %138 : vector<8x1xf32> to vector<8x32xf32>
    %141 = arith.mulf %140, %139 : vector<8x32xf32>
    %142 = arith.addf %137, %141 : vector<8x32xf32>
    %c0_48 = arith.constant 0 : index
    %c0_49 = arith.constant 0 : index
    %c0_50 = arith.constant 0 : index
    %143 = vector.load %arg2[%c0_48, %c0_49, %c0_50] : memref<1x8x1xf32, #tpu.memory_space<vmem>>, vector<1x8x1xf32>
    %144 = vector.shape_cast %143 : vector<1x8x1xf32> to vector<8x1xf32>
    %145 = vector.broadcast %144 : vector<8x1xf32> to vector<8x32xf32>
    %146 = arith.mulf %116, %145 : vector<8x32xf32>
    %147 = vector.broadcast %144 : vector<8x1xf32> to vector<8x32xf32>
    %148 = arith.mulf %142, %147 : vector<8x32xf32>
    %c0_51 = arith.constant 0 : index
    %c0_52 = arith.constant 0 : index
    %149 = vector.load %arg8[%c0_51, %c0_52] : memref<32x32xf32, #tpu.memory_space<vmem>>, vector<32x32xf32>
    %cst_53 = arith.constant dense<0.000000e+00> : vector<8x32xf32>
    %150 = tpu.matmul %146, %149, %cst_53 {dimension_numbers = #tpu.dot_dimension_numbers<[1], [0], [0], [1], [0, 0, 1, 1], [], []>} : vector<8x32xf32>, vector<32x32xf32>, vector<8x32xf32> -> vector<8x32xf32>
    %c0_54 = arith.constant 0 : index
    %c0_55 = arith.constant 0 : index
    %151 = vector.load %arg9[%c0_54, %c0_55] : memref<32x32xf32, #tpu.memory_space<vmem>>, vector<32x32xf32>
    %cst_56 = arith.constant dense<0.000000e+00> : vector<8x32xf32>
    %152 = tpu.matmul %148, %151, %cst_56 {dimension_numbers = #tpu.dot_dimension_numbers<[1], [0], [0], [1], [0, 0, 1, 1], [], []>} : vector<8x32xf32>, vector<32x32xf32>, vector<8x32xf32> -> vector<8x32xf32>
    %153 = arith.addf %150, %152 : vector<8x32xf32>
    %c0_57 = arith.constant 0 : index
    %c0_58 = arith.constant 0 : index
    %154 = vector.load %arg10[%c0_57, %c0_58] : memref<1x32xf32, #tpu.memory_space<vmem>>, vector<1x32xf32>
    %155 = vector.broadcast %154 : vector<1x32xf32> to vector<8x32xf32>
    %156 = arith.addf %153, %155 : vector<8x32xf32>
    %c0_59 = arith.constant 0 : index
    %c0_60 = arith.constant 0 : index
    %c0_61 = arith.constant 0 : index
    %157 = vector.load %arg11[%c0_59, %c0_60, %c0_61] : memref<1x8x32xf32, #tpu.memory_space<vmem>>, vector<1x8x32xf32>
    %158 = vector.shape_cast %157 : vector<1x8x32xf32> to vector<8x32xf32>
    %159 = vector.shape_cast %156 : vector<8x32xf32> to vector<1x8x32xf32>
    tpu.vector_store %arg11[%c0_59, %c0_60, %c0_61], %159 {strides = array<i32>} : memref<1x8x32xf32, #tpu.memory_space<vmem>>, vector<1x8x32xf32>,
    return
  }
  func.func @transform_0(%arg0: i32) -> (i32, i32, i32) {
    %c0_i32 = arith.constant 0 : i32
    %c0_i32_0 = arith.constant 0 : i32
    %c0_i32_1 = arith.constant 0 : i32
    return %arg0, %c0_i32, %c0_i32_0 : i32, i32, i32
  }
  func.func @transform_1(%arg0: i32) -> (i32, i32, i32) {
    %c0_i32 = arith.constant 0 : i32
    %c0_i32_0 = arith.constant 0 : i32
    %c0_i32_1 = arith.constant 0 : i32
    return %arg0, %c0_i32, %c0_i32_0 : i32, i32, i32
  }
  func.func @transform_2(%arg0: i32) -> (i32, i32) {
    %c0_i32 = arith.constant 0 : i32
    %c0_i32_0 = arith.constant 0 : i32
    %c0_i32_1 = arith.constant 0 : i32
    return %c0_i32, %c0_i32_0 : i32, i32
  }
  func.func @transform_3(%arg0: i32) -> (i32, i32) {
    %c0_i32 = arith.constant 0 : i32
    %c0_i32_0 = arith.constant 0 : i32
    %c0_i32_1 = arith.constant 0 : i32
    return %c0_i32, %c0_i32_0 : i32, i32
  }
  func.func @transform_4(%arg0: i32) -> (i32, i32) {
    %c0_i32 = arith.constant 0 : i32
    %c0_i32_0 = arith.constant 0 : i32
    %c0_i32_1 = arith.constant 0 : i32
    return %c0_i32, %c0_i32_0 : i32, i32
  }
  func.func @transform_5(%arg0: i32) -> (i32, i32) {
    %c0_i32 = arith.constant 0 : i32
    %c0_i32_0 = arith.constant 0 : i32
    %c0_i32_1 = arith.constant 0 : i32
    return %c0_i32, %c0_i32_0 : i32, i32
  }
  func.func @transform_6(%arg0: i32) -> (i32, i32) {
    %c0_i32 = arith.constant 0 : i32
    %c0_i32_0 = arith.constant 0 : i32
    %c0_i32_1 = arith.constant 0 : i32
    return %c0_i32, %c0_i32_0 : i32, i32
  }
  func.func @transform_7(%arg0: i32) -> (i32, i32) {
    %c0_i32 = arith.constant 0 : i32
    %c0_i32_0 = arith.constant 0 : i32
    %c0_i32_1 = arith.constant 0 : i32
    return %c0_i32, %c0_i32_0 : i32, i32
  }
  func.func @transform_8(%arg0: i32) -> (i32, i32) {
    %c0_i32 = arith.constant 0 : i32
    %c0_i32_0 = arith.constant 0 : i32
    %c0_i32_1 = arith.constant 0 : i32
    return %c0_i32, %c0_i32_0 : i32, i32
  }
  func.func @transform_9(%arg0: i32) -> (i32, i32) {
    %c0_i32 = arith.constant 0 : i32
    %c0_i32_0 = arith.constant 0 : i32
    %c0_i32_1 = arith.constant 0 : i32
    return %c0_i32, %c0_i32_0 : i32, i32
  }
  func.func @transform_10(%arg0: i32) -> (i32, i32, i32) {
    %c0_i32 = arith.constant 0 : i32
    %c0_i32_0 = arith.constant 0 : i32
    %c0_i32_1 = arith.constant 0 : i32
    return %arg0, %c0_i32, %c0_i32_0 : i32, i32, i32
  }
}

</mosaic_0001>

<llo_original>
// kernel: tpu_custom_call.1
$region0: #{tpu_custom_call.1}
  #allocation0 [shape = 'u32[]', space=smem, size = 0x4, offset = 0x4, fixed_abs, tag = 'smem constant byte address 0x4 - core index']
  #allocation1 [shape = 'u32[144,128]{1,0:T(1,128)}', space=vmem, size = 0x12000, scoped, tag = 'internal scratch']
  #allocation2 [shape = 'f32[12,36]{1,0:T(8,128)}', space=vmem, size = 0x2000, scoped, tag = 'scratch operand']
  %s0 = inlined_call_operand.hbm [shape: f32[2,8,32], index: 0, kind: input, shape index: {}]
  %s1 = inlined_call_operand.hbm [shape: f32[2,8,1], index: 1, kind: input, shape index: {}]
  %s2 = inlined_call_operand.hbm [shape: f32[32,64], index: 2, kind: input, shape index: {}]
  %s3 = inlined_call_operand.hbm [shape: f32[1,64], index: 3, kind: input, shape index: {}]
  %s4 = inlined_call_operand.hbm [shape: f32[32,128], index: 4, kind: input, shape index: {}]
  %s5 = inlined_call_operand.hbm [shape: f32[1,128], index: 5, kind: input, shape index: {}]
  %s6 = inlined_call_operand.hbm [shape: f32[4,32], index: 6, kind: input, shape index: {}]
  %s7 = inlined_call_operand.hbm [shape: f32[32,32], index: 7, kind: input, shape index: {}]
  %s8 = inlined_call_operand.hbm [shape: f32[32,32], index: 8, kind: input, shape index: {}]
  %s9 = inlined_call_operand.hbm [shape: f32[1,32], index: 9, kind: input, shape index: {}]
  %s10 = inlined_call_operand.hbm [shape: f32[2,8,32], index: 10, kind: output, shape index: {}]
  %s11 = sld [smem:[#allocation0]]
  $region113: #{tpu_custom_call.1} parent=0
    _
  %s13 = ssub.s32 1, %s11
  %s14 = scalar_select 0, %s13, %s11
  $region1: #{tpu_custom_call.1} parent=0
    #allocation3 [shape = 'u8[8192]{0}', space=vmem, size = 0x2000, scoped, tag = 'input window, operand 0']
    #allocation4 [shape = 's32[2]{0}', space=sflag, size = 0x8, scoped, tag = 'scoped memory for tpu_custom_call.1']
    #allocation5 [shape = 's32[2]{0}', space=sflag, size = 0x8, scoped, tag = 'scoped memory for tpu_custom_call.1']
    #allocation6 [shape = 'u8[8192]{0}', space=vmem, size = 0x2000, scoped, tag = 'input window, operand 1']
    #allocation7 [shape = 's32[2]{0}', space=sflag, size = 0x8, scoped, tag = 'scoped memory for tpu_custom_call.1']
    #allocation8 [shape = 'u8[16384]{0}', space=vmem, size = 0x4000, scoped, tag = 'input window, operand 2, single buffered']
    #allocation9 [shape = 'u8[512]{0}', space=vmem, size = 0x400, scoped, tag = 'input window, operand 3, single buffered']
    #allocation10 [shape = 's32[1]{0}', space=sflag, size = 0x4, scoped, tag = 'scoped memory for tpu_custom_call.1']
    #allocation11 [shape = 'u8[16384]{0}', space=vmem, size = 0x4000, scoped, tag = 'input window, operand 4, single buffered']
    #allocation12 [shape = 'u8[512]{0}', space=vmem, size = 0x400, scoped, tag = 'input window, operand 5, single buffered']
    #allocation13 [shape = 's32[1]{0}', space=sflag, size = 0x4, scoped, tag = 'scoped memory for tpu_custom_call.1']
    #allocation14 [shape = 'u8[2048]{0}', space=vmem, size = 0x800, scoped, tag = 'input window, operand 6, single buffered']
    #allocation15 [shape = 'u8[16384]{0}', space=vmem, size = 0x4000, scoped, tag = 'input window, operand 7, single buffered']
    #allocation16 [shape = 's32[1]{0}', space=sflag, size = 0x4, scoped, tag = 'scoped memory for tpu_custom_call.1']
    #allocation17 [shape = 'u8[16384]{0}', space=vmem, size = 0x4000, scoped, tag = 'input window, operand 8, single buffered']
    #allocation18 [shape = 'u8[512]{0}', space=vmem, size = 0x400, scoped, tag = 'input window, operand 9, single buffered']
    #allocation19 [shape = 's32[1]{0}', space=sflag, size = 0x4, scoped, tag = 'scoped memory for tpu_custom_call.1']
    #allocation20 [shape = 'u8[8192]{0}', space=vmem, size = 0x2000, scoped, tag = 'output window, operand 0']
    %15 = vsyncpa [#allocation4], 0
    %s16 = scalar_lea.sflag [#allocation4], 1
    %17 = vsyncpa %s16, 0
    %18 = vsyncpa [#allocation7], 0
    %s19 = scalar_lea.sflag [#allocation7], 1
    %20 = vsyncpa %s19, 0
    %21 = vsyncpa [#allocation10], 0
    %22 = vsyncpa [#allocation13], 0
    %23 = vsyncpa [#allocation16], 0
    %24 = vsyncpa [#allocation19], 0
    %25 = vsyncpa [#allocation5], 0
    %s26 = scalar_lea.sflag [#allocation5], 1
    %27 = vsyncpa %s26, 0
    loop: start=0, step=1, limit=4
    $region2: #{tpu_custom_call.1} parent=1 // loop_pre_header
      _
    $region3: #{tpu_custom_call.1} parent=1 // loop_header
      %s29 = sphi 0, %s33
      %p30 = scmp.ge.s32.totalorder %s29, 4
      %s39 = sphi 0, %s41
      %s42 = sphi 0, %s39
      %s43 = sphi 0, %s42
      %s59 = sphi 0, %s43
      %s65 = sphi 0, %s67
      %s68 = sphi 0, %s65
      %s69 = sphi 0, %s68
      %s85 = sphi 0, %s69
      %s89 = sphi 0, %s89
      %s91 = sphi 0, %s89
      %s92 = sphi 0, %s91
      %s106 = sphi 0, %s92
      %s110 = sphi 0, %s110
      %s112 = sphi 0, %s110
      %s113 = sphi 0, %s112
      %s127 = sphi 0, %s113
      %s131 = sphi 0, %s131
      %s133 = sphi 0, %s131
      %s134 = sphi 0, %s133
      %s148 = sphi 0, %s134
      %s152 = sphi 0, %s152
      %s154 = sphi 0, %s152
      %s155 = sphi 0, %s154
      %s169 = sphi 0, %s155
      %s173 = sphi 0, %s173
      %s175 = sphi 0, %s173
      %s176 = sphi 0, %s175
      %s190 = sphi 0, %s176
      %s194 = sphi 0, %s194
      %s196 = sphi 0, %s194
      %s197 = sphi 0, %s196
      %s211 = sphi 0, %s197
      %s215 = sphi 0, %s215
      %s217 = sphi 0, %s215
      %s218 = sphi 0, %s217
      %s232 = sphi 0, %s218
      %s236 = sphi 0, %s236
      %s238 = sphi 0, %s236
      %s239 = sphi 0, %s238
      %s253 = sphi 0, %s239
      %s259 = sphi 0, %s261
      %s262 = sphi 0, %s259
      %s263 = sphi 0, %s262
      %s279 = sphi 0, %s263
    $region4: #{tpu_custom_call.1} parent=1 // loop_header_branch
      %32 = sbr.rel (%p30) target = $region8
    $region5: #{tpu_custom_call.1} parent=1 // loop_body
      %s34 = ssub.s32 %s29, 1
      %s35 = ssub.s32 %s29, 2
      %s36 = sadd.s32 %s29, 1
      %s37 = ssub.s32 %s29, %s36
      %p38 = scmp.eq.s32.totalorder %s37, 0
      %s40 = sadd.s32 %s39, 1
      %s41 = scalar_select %p38, %s39, %s40
      %p44 = pneg %p38
      %p45 = scmp.eq.s32.totalorder %s29, 1
      %p46 = por %p44, %p45
      %p47 = scmp.ne.s32.totalorder %s39, %s42
      %p48 = scmp.eq.s32.totalorder %s29, 0
      %p49 = por %p47, %p48
      %p50 = scmp.ne.s32.totalorder %s39, %s42
      %p51 = scmp.eq.s32.totalorder %s34, 1
      %p52 = por %p50, %p51
      %p53 = scmp.ne.s32.totalorder %s42, %s43
      %p54 = scmp.eq.s32.totalorder %s34, 0
      %p55 = por %p53, %p54
      %p56 = scmp.ne.s32.totalorder %s42, %s43
      %p57 = scmp.eq.s32.totalorder %s35, 1
      %p58 = por %p56, %p57
      %p60 = scmp.ne.s32.totalorder %s43, %s59
      %p61 = scmp.eq.s32.totalorder %s35, 0
      %p62 = por %p60, %p61
      %s63 = ssub.s32 %s29, %s36
      %p64 = scmp.eq.s32.totalorder %s63, 0
      %s66 = sadd.s32 %s65, 1
      %s67 = scalar_select %p64, %s65, %s66
      %p70 = pneg %p64
      %p71 = scmp.eq.s32.totalorder %s29, 1
      %p72 = por %p70, %p71
      %p73 = scmp.ne.s32.totalorder %s65, %s68
      %p74 = scmp.eq.s32.totalorder %s29, 0
      %p75 = por %p73, %p74
      %p76 = scmp.ne.s32.totalorder %s65, %s68
      %p77 = scmp.eq.s32.totalorder %s34, 1
      %p78 = por %p76, %p77
      %p79 = scmp.ne.s32.totalorder %s68, %s69
      %p80 = scmp.eq.s32.totalorder %s34, 0
      %p81 = por %p79, %p80
      %p82 = scmp.ne.s32.totalorder %s68, %s69
      %p83 = scmp.eq.s32.totalorder %s35, 1
      %p84 = por %p82, %p83
      %p86 = scmp.ne.s32.totalorder %s69, %s85
      %p87 = scmp.eq.s32.totalorder %s35, 0
      %p88 = por %p86, %p87
      %s90 = sadd.s32 %s89, 1
      %p93 = scmp.eq.s32.totalorder %s29, 1
      %p94 = scmp.ne.s32.totalorder %s89, %s91
      %p95 = scmp.eq.s32.totalorder %s29, 0
      %p96 = por %p94, %p95
      %p97 = scmp.ne.s32.totalorder %s89, %s91
      %p98 = scmp.eq.s32.totalorder %s34, 1
      %p99 = por %p97, %p98
      %p100 = scmp.ne.s32.totalorder %s91, %s92
      %p101 = scmp.eq.s32.totalorder %s34, 0
      %p102 = por %p100, %p101
      %p103 = scmp.ne.s32.totalorder %s91, %s92
      %p104 = scmp.eq.s32.totalorder %s35, 1
      %p105 = por %p103, %p104
      %p107 = scmp.ne.s32.totalorder %s92, %s106
      %p108 = scmp.eq.s32.totalorder %s35, 0
      %p109 = por %p107, %p108
      %s111 = sadd.s32 %s110, 1
      %p114 = scmp.eq.s32.totalorder %s29, 1
      %p115 = scmp.ne.s32.totalorder %s110, %s112
      %p116 = scmp.eq.s32.totalorder %s29, 0
      %p117 = por %p115, %p116
      %p118 = scmp.ne.s32.totalorder %s110, %s112
      %p119 = scmp.eq.s32.totalorder %s34, 1
      %p120 = por %p118, %p119
      %p121 = scmp.ne.s32.totalorder %s112, %s113
      %p122 = scmp.eq.s32.totalorder %s34, 0
      %p123 = por %p121, %p122
      %p124 = scmp.ne.s32.totalorder %s112, %s113
      %p125 = scmp.eq.s32.totalorder %s35, 1
      %p126 = por %p124, %p125
      %p128 = scmp.ne.s32.totalorder %s113, %s127
      %p129 = scmp.eq.s32.totalorder %s35, 0
      %p130 = por %p128, %p129
      %s132 = sadd.s32 %s131, 1
      %p135 = scmp.eq.s32.totalorder %s29, 1
      %p136 = scmp.ne.s32.totalorder %s131, %s133
      %p137 = scmp.eq.s32.totalorder %s29, 0
      %p138 = por %p136, %p137
      %p139 = scmp.ne.s32.totalorder %s131, %s133
      %p140 = scmp.eq.s32.totalorder %s34, 1
      %p141 = por %p139, %p140
      %p142 = scmp.ne.s32.totalorder %s133, %s134
      %p143 = scmp.eq.s32.totalorder %s34, 0
      %p144 = por %p142, %p143
      %p145 = scmp.ne.s32.totalorder %s133, %s134
      %p146 = scmp.eq.s32.totalorder %s35, 1
      %p147 = por %p145, %p146
      %p149 = scmp.ne.s32.totalorder %s134, %s148
      %p150 = scmp.eq.s32.totalorder %s35, 0
      %p151 = por %p149, %p150
      %s153 = sadd.s32 %s152, 1
      %p156 = scmp.eq.s32.totalorder %s29, 1
      %p157 = scmp.ne.s32.totalorder %s152, %s154
      %p158 = scmp.eq.s32.totalorder %s29, 0
      %p159 = por %p157, %p158
      %p160 = scmp.ne.s32.totalorder %s152, %s154
      %p161 = scmp.eq.s32.totalorder %s34, 1
      %p162 = por %p160, %p161
      %p163 = scmp.ne.s32.totalorder %s154, %s155
      %p164 = scmp.eq.s32.totalorder %s34, 0
      %p165 = por %p163, %p164
      %p166 = scmp.ne.s32.totalorder %s154, %s155
      %p167 = scmp.eq.s32.totalorder %s35, 1
      %p168 = por %p166, %p167
      %p170 = scmp.ne.s32.totalorder %s155, %s169
      %p171 = scmp.eq.s32.totalorder %s35, 0
      %p172 = por %p170, %p171
      %s174 = sadd.s32 %s173, 1
      %p177 = scmp.eq.s32.totalorder %s29, 1
      %p178 = scmp.ne.s32.totalorder %s173, %s175
      %p179 = scmp.eq.s32.totalorder %s29, 0
      %p180 = por %p178, %p179
      %p181 = scmp.ne.s32.totalorder %s173, %s175
      %p182 = scmp.eq.s32.totalorder %s34, 1
      %p183 = por %p181, %p182
      %p184 = scmp.ne.s32.totalorder %s175, %s176
      %p185 = scmp.eq.s32.totalorder %s34, 0
      %p186 = por %p184, %p185
      %p187 = scmp.ne.s32.totalorder %s175, %s176
      %p188 = scmp.eq.s32.totalorder %s35, 1
      %p189 = por %p187, %p188
      %p191 = scmp.ne.s32.totalorder %s176, %s190
      %p192 = scmp.eq.s32.totalorder %s35, 0
      %p193 = por %p191, %p192
      %s195 = sadd.s32 %s194, 1
      %p198 = scmp.eq.s32.totalorder %s29, 1
      %p199 = scmp.ne.s32.totalorder %s194, %s196
      %p200 = scmp.eq.s32.totalorder %s29, 0
      %p201 = por %p199, %p200
      %p202 = scmp.ne.s32.totalorder %s194, %s196
      %p203 = scmp.eq.s32.totalorder %s34, 1
      %p204 = por %p202, %p203
      %p205 = scmp.ne.s32.totalorder %s196, %s197
      %p206 = scmp.eq.s32.totalorder %s34, 0
      %p207 = por %p205, %p206
      %p208 = scmp.ne.s32.totalorder %s196, %s197
      %p209 = scmp.eq.s32.totalorder %s35, 1
      %p210 = por %p208, %p209
      %p212 = scmp.ne.s32.totalorder %s197, %s211
      %p213 = scmp.eq.s32.totalorder %s35, 0
      %p214 = por %p212, %p213
      %s216 = sadd.s32 %s215, 1
      %p219 = scmp.eq.s32.totalorder %s29, 1
      %p220 = scmp.ne.s32.totalorder %s215, %s217
      %p221 = scmp.eq.s32.totalorder %s29, 0
      %p222 = por %p220, %p221
      %p223 = scmp.ne.s32.totalorder %s215, %s217
      %p224 = scmp.eq.s32.totalorder %s34, 1
      %p225 = por %p223, %p224
      %p226 = scmp.ne.s32.totalorder %s217, %s218
      %p227 = scmp.eq.s32.totalorder %s34, 0
      %p228 = por %p226, %p227
      %p229 = scmp.ne.s32.totalorder %s217, %s218
      %p230 = scmp.eq.s32.totalorder %s35, 1
      %p231 = por %p229, %p230
      %p233 = scmp.ne.s32.totalorder %s218, %s232
      %p234 = scmp.eq.s32.totalorder %s35, 0
      %p235 = por %p233, %p234
      %s237 = sadd.s32 %s236, 1
      %p240 = scmp.eq.s32.totalorder %s29, 1
      %p241 = scmp.ne.s32.totalorder %s236, %s238
      %p242 = scmp.eq.s32.totalorder %s29, 0
      %p243 = por %p241, %p242
      %p244 = scmp.ne.s32.totalorder %s236, %s238
      %p245 = scmp.eq.s32.totalorder %s34, 1
      %p246 = por %p244, %p245
      %p247 = scmp.ne.s32.totalorder %s238, %s239
      %p248 = scmp.eq.s32.totalorder %s34, 0
      %p249 = por %p247, %p248
      %p250 = scmp.ne.s32.totalorder %s238, %s239
      %p251 = scmp.eq.s32.totalorder %s35, 1
      %p252 = por %p250, %p251
      %p254 = scmp.ne.s32.totalorder %s239, %s253
      %p255 = scmp.eq.s32.totalorder %s35, 0
      %p256 = por %p254, %p255
      %s257 = ssub.s32 %s29, %s36
      %p258 = scmp.eq.s32.totalorder %s257, 0
      %s260 = sadd.s32 %s259, 1
      %s261 = scalar_select %p258, %s259, %s260
      %p264 = pneg %p258
      %p265 = scmp.eq.s32.totalorder %s29, 1
      %p266 = por %p264, %p265
      %p267 = scmp.ne.s32.totalorder %s259, %s262
      %p268 = scmp.eq.s32.totalorder %s29, 0
      %p269 = por %p267, %p268
      %p270 = scmp.ne.s32.totalorder %s259, %s262
      %p271 = scmp.eq.s32.totalorder %s34, 1
      %p272 = por %p270, %p271
      %p273 = scmp.ne.s32.totalorder %s262, %s263
      %p274 = scmp.eq.s32.totalorder %s34, 0
      %p275 = por %p273, %p274
      %p276 = scmp.ne.s32.totalorder %s262, %s263
      %p277 = scmp.eq.s32.totalorder %s35, 1
      %p278 = por %p276, %p277
      %p280 = scmp.ne.s32.totalorder %s263, %s279
      %p281 = scmp.eq.s32.totalorder %s35, 0
      %p282 = por %p280, %p281
      %p283 = scmp.le.s32.totalorder 1, %s29
      %p284 = scmp.lt.s32.totalorder %s29, 3
      %p285 = pnand %p283, %p284
      %p286 = pneg %p285
      // Predicated region
      $region9: #{tpu_custom_call.1} parent=5 // pred_check
        _
      $region10: #{tpu_custom_call.1} parent=5 // pred_check_branch
        %288 = sbr.rel (%p285) target = $region12
      $region11: #{tpu_custom_call.1} parent=5 // pred_region
        %s289 = ssub.s32 %s29, 1
        // Predicated region
        $region13: #{tpu_custom_call.1} parent=11 // pred_check
          %p290 = pneg %p102
        $region14: #{tpu_custom_call.1} parent=11 // pred_check_branch
          %292 = sbr.rel (%p290) target = $region16
        $region15: #{tpu_custom_call.1} parent=11 // pred_region
          %s294 = ssub.s32 512, 512
          %295 = vsyncadd [#allocation7], %s294
          %s296 = sshll.u32 [#allocation8], 4
          %s297 = int_to_ptr.vmem [resolvable:$true] %s296
          %302 = dma.hbm_to_vmem [thread:$0]  %s2, 512, %s297, [#allocation7], 128, 128, 8
        $region16: #{tpu_custom_call.1} parent=11 // pred_fallthru
          _
        // Predicated region
        $region17: #{tpu_custom_call.1} parent=11 // pred_check
          %p303 = pneg %p123
        $region18: #{tpu_custom_call.1} parent=11 // pred_check_branch
          %305 = sbr.rel (%p303) target = $region20
        $region19: #{tpu_custom_call.1} parent=11 // pred_region
          %s307 = ssub.s32 16, 16
          %308 = vsyncadd [#allocation10], %s307
          %s310 = sshll.u32 [#allocation9], 4
          %s311 = int_to_ptr.vmem [resolvable:$true] %s310
          %313 = dma.hbm_to_vmem [thread:$0]  %s3, 16, %s311, [#allocation10]
        $region20: #{tpu_custom_call.1} parent=11 // pred_fallthru
          _
        // Predicated region
        $region21: #{tpu_custom_call.1} parent=11 // pred_check
          %p314 = pneg %p144
        $region22: #{tpu_custom_call.1} parent=11 // pred_check_branch
          %316 = sbr.rel (%p314) target = $region24
        $region23: #{tpu_custom_call.1} parent=11 // pred_region
          %s318 = ssub.s32 512, 512
          %319 = vsyncadd [#allocation10], %s318
          %s320 = sshll.u32 [#allocation11], 4
          %s321 = int_to_ptr.vmem [resolvable:$true] %s320
          %326 = dma.hbm_to_vmem [thread:$0]  %s4, 512, %s321, [#allocation10], 128, 128, 8
        $region24: #{tpu_custom_call.1} parent=11 // pred_fallthru
          _
        // Predicated region
        $region25: #{tpu_custom_call.1} parent=11 // pred_check
          %p327 = pneg %p165
        $region26: #{tpu_custom_call.1} parent=11 // pred_check_branch
          %329 = sbr.rel (%p327) target = $region28
        $region27: #{tpu_custom_call.1} parent=11 // pred_region
          %s331 = ssub.s32 16, 16
          %332 = vsyncadd [#allocation13], %s331
          %s334 = sshll.u32 [#allocation12], 4
          %s335 = int_to_ptr.vmem [resolvable:$true] %s334
          %337 = dma.hbm_to_vmem [thread:$0]  %s5, 16, %s335, [#allocation13]
        $region28: #{tpu_custom_call.1} parent=11 // pred_fallthru
          _
        // Predicated region
        $region29: #{tpu_custom_call.1} parent=11 // pred_check
          %p338 = pneg %p186
        $region30: #{tpu_custom_call.1} parent=11 // pred_check_branch
          %340 = sbr.rel (%p338) target = $region32
        $region31: #{tpu_custom_call.1} parent=11 // pred_region
          %s342 = ssub.s32 64, 64
          %343 = vsyncadd [#allocation13], %s342
          %s345 = sshll.u32 [#allocation14], 4
          %s346 = int_to_ptr.vmem [resolvable:$true] %s345
          %348 = dma.hbm_to_vmem [thread:$0]  %s6, 64, %s346, [#allocation13]
        $region32: #{tpu_custom_call.1} parent=11 // pred_fallthru
          _
        // Predicated region
        $region33: #{tpu_custom_call.1} parent=11 // pred_check
          %p349 = pneg %p207
        $region34: #{tpu_custom_call.1} parent=11 // pred_check_branch
          %351 = sbr.rel (%p349) target = $region36
        $region35: #{tpu_custom_call.1} parent=11 // pred_region
          %s353 = ssub.s32 512, 512
          %354 = vsyncadd [#allocation16], %s353
          %s355 = sshll.u32 [#allocation15], 4
          %s356 = int_to_ptr.vmem [resolvable:$true] %s355
          %361 = dma.hbm_to_vmem [thread:$0]  %s7, 512, %s356, [#allocation16], 128, 128, 8
        $region36: #{tpu_custom_call.1} parent=11 // pred_fallthru
          _
        // Predicated region
        $region37: #{tpu_custom_call.1} parent=11 // pred_check
          %p362 = pneg %p228
        $region38: #{tpu_custom_call.1} parent=11 // pred_check_branch
          %364 = sbr.rel (%p362) target = $region40
        $region39: #{tpu_custom_call.1} parent=11 // pred_region
          %s366 = ssub.s32 512, 512
          %367 = vsyncadd [#allocation16], %s366
          %s368 = sshll.u32 [#allocation17], 4
          %s369 = int_to_ptr.vmem [resolvable:$true] %s368
          %374 = dma.hbm_to_vmem [thread:$0]  %s8, 512, %s369, [#allocation16], 128, 128, 8
        $region40: #{tpu_custom_call.1} parent=11 // pred_fallthru
          _
        // Predicated region
        $region41: #{tpu_custom_call.1} parent=11 // pred_check
          %p375 = pneg %p249
        $region42: #{tpu_custom_call.1} parent=11 // pred_check_branch
          %377 = sbr.rel (%p375) target = $region44
        $region43: #{tpu_custom_call.1} parent=11 // pred_region
          %s379 = ssub.s32 16, 16
          %380 = vsyncadd [#allocation19], %s379
          %s382 = sshll.u32 [#allocation18], 4
          %s383 = int_to_ptr.vmem [resolvable:$true] %s382
          %385 = dma.hbm_to_vmem [thread:$0]  %s9, 16, %s383, [#allocation19]
        $region44: #{tpu_custom_call.1} parent=11 // pred_fallthru
          _
      $region12: #{tpu_custom_call.1} parent=5 // pred_fallthru
        _
      %p386 = scmp.lt.s32.totalorder %s29, 2
      // Predicated region
      $region45: #{tpu_custom_call.1} parent=5 // pred_check
        %p387 = pneg %p386
      $region46: #{tpu_custom_call.1} parent=5 // pred_check_branch
        %389 = sbr.rel (%p387) target = $region48
      $region47: #{tpu_custom_call.1} parent=5 // pred_region
        // Predicated region
        $region49: #{tpu_custom_call.1} parent=47 // pred_check
          %p390 = pneg %p49
        $region50: #{tpu_custom_call.1} parent=47 // pred_check_branch
          %392 = sbr.rel (%p390) target = $region52
        $region51: #{tpu_custom_call.1} parent=47 // pred_region
          %s393 = sand.u32 %s39, 1
          %s394 = scalar_lea.sflag [#allocation4], %s393
          %s395 = sand.u32 %s39, 1
          %s396 = smul.addr %s395, 8
          %s397 = scalar_lea.vmem [#allocation3], %s396
          %s399 = ssub.s32 128, 128
          %400 = vsyncadd %s394, %s399
          %s401 = smul.addr %s29, 128
          %s402 = scalar_lea.hbm %s0, %s401
          %s404 = sshll.u32 %s397, 4
          %s405 = int_to_ptr.vmem [resolvable:$true] %s404
          %407 = dma.hbm_to_vmem [thread:$0]  %s402, 128, %s405, %s394
        $region52: #{tpu_custom_call.1} parent=47 // pred_fallthru
          _
        // Predicated region
        $region53: #{tpu_custom_call.1} parent=47 // pred_check
          %p408 = pneg %p75
        $region54: #{tpu_custom_call.1} parent=47 // pred_check_branch
          %410 = sbr.rel (%p408) target = $region56
        $region55: #{tpu_custom_call.1} parent=47 // pred_region
          %s411 = sand.u32 %s29, 1
          %s412 = scalar_lea.sflag [#allocation7], %s411
          %s413 = sand.u32 %s65, 1
          %s414 = smul.addr %s413, 8
          %s415 = scalar_lea.vmem [#allocation6], %s414
          %s417 = ssub.s32 128, 128
          %418 = vsyncadd %s412, %s417
          %s419 = smul.addr %s29, 128
          %s420 = scalar_lea.hbm %s1, %s419
          %s422 = sshll.u32 %s415, 4
          %s423 = int_to_ptr.vmem [resolvable:$true] %s422
          %425 = dma.hbm_to_vmem [thread:$0]  %s420, 128, %s423, %s412
        $region56: #{tpu_custom_call.1} parent=47 // pred_fallthru
          _
      $region48: #{tpu_custom_call.1} parent=5 // pred_fallthru
        _
      %p426 = scmp.le.s32.totalorder 1, %s29
      %p427 = scmp.lt.s32.totalorder %s29, 3
      %p428 = pnand %p426, %p427
      %p429 = pneg %p428
      // Predicated region
      $region57: #{tpu_custom_call.1} parent=5 // pred_check
        _
      $region58: #{tpu_custom_call.1} parent=5 // pred_check_branch
        %431 = sbr.rel (%p428) target = $region60
      $region59: #{tpu_custom_call.1} parent=5 // pred_region
        %s432 = ssub.s32 %s29, 1
        %s433 = sand.u32 %s42, 1
        %s434 = scalar_lea.sflag [#allocation4], %s433
        %s435 = sand.u32 %s42, 1
        %s436 = smul.addr %s435, 8
        %s437 = scalar_lea.vmem [#allocation3], %s436
        // Predicated region
        $region61: #{tpu_custom_call.1} parent=59 // pred_check
          %p438 = pneg %p55
        $region62: #{tpu_custom_call.1} parent=59 // pred_check_branch
          %440 = sbr.rel (%p438) target = $region64
        $region63: #{tpu_custom_call.1} parent=59 // pred_region
          %441 = dma.done %s434, 128
        $region64: #{tpu_custom_call.1} parent=59 // pred_fallthru
          _
        %s442 = sand.u32 %s34, 1
        %s443 = scalar_lea.sflag [#allocation7], %s442
        %s444 = sand.u32 %s68, 1
        %s445 = smul.addr %s444, 8
        %s446 = scalar_lea.vmem [#allocation6], %s445
        // Predicated region
        $region65: #{tpu_custom_call.1} parent=59 // pred_check
          %p447 = pneg %p81
        $region66: #{tpu_custom_call.1} parent=59 // pred_check_branch
          %449 = sbr.rel (%p447) target = $region68
        $region67: #{tpu_custom_call.1} parent=59 // pred_region
          %450 = dma.done %s443, 128
        $region68: #{tpu_custom_call.1} parent=59 // pred_fallthru
          _
        // Predicated region
        $region69: #{tpu_custom_call.1} parent=59 // pred_check
          %p451 = pneg %p102
        $region70: #{tpu_custom_call.1} parent=59 // pred_check_branch
          %453 = sbr.rel (%p451) target = $region72
        $region71: #{tpu_custom_call.1} parent=59 // pred_region
          %454 = dma.done [#allocation7], 512
        $region72: #{tpu_custom_call.1} parent=59 // pred_fallthru
          _
        // Predicated region
        $region73: #{tpu_custom_call.1} parent=59 // pred_check
          %p455 = pneg %p123
        $region74: #{tpu_custom_call.1} parent=59 // pred_check_branch
          %457 = sbr.rel (%p455) target = $region76
        $region75: #{tpu_custom_call.1} parent=59 // pred_region
          %458 = dma.done [#allocation10], 16
        $region76: #{tpu_custom_call.1} parent=59 // pred_fallthru
          _
        // Predicated region
        $region77: #{tpu_custom_call.1} parent=59 // pred_check
          %p459 = pneg %p144
        $region78: #{tpu_custom_call.1} parent=59 // pred_check_branch
          %461 = sbr.rel (%p459) target = $region80
        $region79: #{tpu_custom_call.1} parent=59 // pred_region
          %462 = dma.done [#allocation10], 512
        $region80: #{tpu_custom_call.1} parent=59 // pred_fallthru
          _
        // Predicated region
        $region81: #{tpu_custom_call.1} parent=59 // pred_check
          %p463 = pneg %p165
        $region82: #{tpu_custom_call.1} parent=59 // pred_check_branch
          %465 = sbr.rel (%p463) target = $region84
        $region83: #{tpu_custom_call.1} parent=59 // pred_region
          %466 = dma.done [#allocation13], 16
        $region84: #{tpu_custom_call.1} parent=59 // pred_fallthru
          _
        // Predicated region
        $region85: #{tpu_custom_call.1} parent=59 // pred_check
          %p467 = pneg %p186
        $region86: #{tpu_custom_call.1} parent=59 // pred_check_branch
          %469 = sbr.rel (%p467) target = $region88
        $region87: #{tpu_custom_call.1} parent=59 // pred_region
          %470 = dma.done [#allocation13], 64
        $region88: #{tpu_custom_call.1} parent=59 // pred_fallthru
          _
        // Predicated region
        $region89: #{tpu_custom_call.1} parent=59 // pred_check
          %p471 = pneg %p207
        $region90: #{tpu_custom_call.1} parent=59 // pred_check_branch
          %473 = sbr.rel (%p471) target = $region92
        $region91: #{tpu_custom_call.1} parent=59 // pred_region
          %474 = dma.done [#allocation16], 512
        $region92: #{tpu_custom_call.1} parent=59 // pred_fallthru
          _
        // Predicated region
        $region93: #{tpu_custom_call.1} parent=59 // pred_check
          %p475 = pneg %p228
        $region94: #{tpu_custom_call.1} parent=59 // pred_check_branch
          %477 = sbr.rel (%p475) target = $region96
        $region95: #{tpu_custom_call.1} parent=59 // pred_region
          %478 = dma.done [#allocation16], 512
        $region96: #{tpu_custom_call.1} parent=59 // pred_fallthru
          _
        // Predicated region
        $region97: #{tpu_custom_call.1} parent=59 // pred_check
          %p479 = pneg %p249
        $region98: #{tpu_custom_call.1} parent=59 // pred_check_branch
          %481 = sbr.rel (%p479) target = $region100
        $region99: #{tpu_custom_call.1} parent=59 // pred_region
          %482 = dma.done [#allocation19], 16
        $region100: #{tpu_custom_call.1} parent=59 // pred_fallthru
          _
        %s483 = sand.u32 %s42, 1
        %s484 = scalar_lea.sflag [#allocation4], %s483
        %s485 = sand.u32 %s42, 1
        %s486 = smul.addr %s485, 8
        %s487 = scalar_lea.vmem [#allocation3], %s486
        %p488 = pneg %p55
        %p489 = pneg %p52
        %s490 = sand.u32 %s34, 1
        %s491 = scalar_lea.sflag [#allocation7], %s490
        %s492 = sand.u32 %s68, 1
        %s493 = smul.addr %s492, 8
        %s494 = scalar_lea.vmem [#allocation6], %s493
        %p495 = pneg %p81
        %p496 = pneg %p78
        %p497 = pneg %p102
        %p498 = pneg %p99
        %p499 = pneg %p123
        %p500 = pneg %p120
        %p501 = pneg %p144
        %p502 = pneg %p141
        %p503 = pneg %p165
        %p504 = pneg %p162
        %p505 = pneg %p186
        %p506 = pneg %p183
        %p507 = pneg %p207
        %p508 = pneg %p204
        %p509 = pneg %p228
        %p510 = pneg %p225
        %p511 = pneg %p249
        %p512 = pneg %p246
        %p513 = pneg %p275
        %p514 = pneg %p272
        %s515 = sand.u32 %s262, 1
        %s516 = scalar_lea.sflag [#allocation5], %s515
        %s517 = sand.u32 %s262, 1
        %s518 = smul.addr %s517, 8
        %s519 = scalar_lea.vmem [#allocation20], %s518
        %v520 = vld [vmem:[%s437] sm:$0xff]
        %v521 = vld [vmem:[#allocation8] sm:$0xff]
        %v522 = vld [vmem:[#allocation8 + $0x8] sm:$0xff]
        %v523 = vld [vmem:[#allocation8 + $0x10] sm:$0xff]
        %v524 = vld [vmem:[#allocation8 + $0x18] sm:$0xff]
        %v525 = vld [vmem:[#allocation9] sm:$0x1]
        %v527 = vlaneseq
        %v528 = vshrl.u32 %v527, 7
        %v529 = vsub.s32 0, %v528
        %v530 = vrot.slane %v525, %v529
        %vm532 = vcmask 261120
        %v534 = vsel %vm532, %v520, 0
        %536 = vmatprep.subr.mxu0 0.0
        %537 = vmatpush1.msra.mxu0 %v521
        %538 = vmatprep.subr.mxu0 0.0
        %539 = vmatpush1.msra.mxu0 %v522
        %540 = vmatprep.subr.mxu0 0.0
        %541 = vmatpush1.msra.mxu0 %v523
        %542 = vmatprep.subr.mxu0 0.0
        %543 = vmatpush1.msra.mxu0 %v524
        %544 = vmatprep.subr.mxu0 0.0
        %545 = vmatpush1.msra.mxu0 0.0
        %546 = vmatprep.subr.mxu0 0.0
        %547 = vmatpush1.msra.mxu0 0.0
        %548 = vmatprep.subr.mxu0 0.0
        %549 = vmatpush1.msra.mxu0 0.0
        %550 = vmatprep.subr.mxu0 0.0
        %551 = vmatpush1.msra.mxu0 0.0
        %552 = vmatprep.subr.mxu0 0.0
        %553 = vmatpush1.msra.mxu0 0.0
        %554 = vmatprep.subr.mxu0 0.0
        %555 = vmatpush1.msra.mxu0 0.0
        %556 = vmatprep.subr.mxu0 0.0
        %557 = vmatpush1.msra.mxu0 0.0
        %558 = vmatprep.subr.mxu0 0.0
        %559 = vmatpush1.msra.mxu0 0.0
        %560 = vmatprep.subr.mxu0 0.0
        %561 = vmatpush1.msra.mxu0 0.0
        %562 = vmatprep.subr.mxu0 0.0
        %563 = vmatpush1.msra.mxu0 0.0
        %564 = vmatprep.subr.mxu0 0.0
        %565 = vmatpush1.msra.mxu0 0.0
        %566 = vmatprep.subr.mxu0 0.0
        %567 = vmatpush1.msra.mxu0 0.0
        %568 = vmatprep.subr.mxu0 0.0
        %569 = vmatpush1.msra.mxu0 0.0
        %570 = vmatprep.subr.mxu0 0.0
        %571 = vmatpush1.msra.mxu0 0.0
        %572 = vmatprep.subr.mxu0 0.0
        %573 = vmatpush1.msra.mxu0 0.0
        %574 = vmatprep.subr.mxu0 0.0
        %575 = vmatpush1.msra.mxu0 0.0
        %576 = vmatprep.subr.mxu0 0.0
        %577 = vmatpush1.msra.mxu0 0.0
        %578 = vmatprep.subr.mxu0 0.0
        %579 = vmatpush1.msra.mxu0 0.0
        %580 = vmatprep.subr.mxu0 0.0
        %581 = vmatpush1.msra.mxu0 0.0
        %582 = vmatprep.subr.mxu0 0.0
        %583 = vmatpush1.msra.mxu0 0.0
        %584 = vmatprep.subr.mxu0 0.0
        %585 = vmatpush1.msra.mxu0 0.0
        %586 = vmatprep.subr.mxu0 0.0
        %587 = vmatpush1.msra.mxu0 0.0
        %588 = vmatprep.subr.mxu0 0.0
        %589 = vmatpush1.msra.mxu0 0.0
        %590 = vmatprep.subr.mxu0 0.0
        %591 = vmatpush1.msra.mxu0 0.0
        %592 = vmatprep.subr.mxu0 0.0
        %593 = vmatpush1.msra.mxu0 0.0
        %594 = vmatprep.subr.mxu0 0.0
        %595 = vmatpush1.msra.mxu0 0.0
        %596 = vmatprep.subr.mxu0 0.0
        %597 = vmatpush1.msra.mxu0 0.0
        %598 = vmatprep.subr.mxu0 0.0
        %599 = vmatpush1.msra.mxu0 0.0
        %600 = vmatprep.mubr.f32.mxu0 0.0
        %601 = vmatmul.mubr.f32.gmra.mrb[0].mxu0 %v534
        %v602 = vpop.f32.mrb[0].mxu0
        %v603 = vadd.f32 %v530, %v602
        %v604 = vpop.f32.mrb[0].mxu0
        %605 = vdwg.mxu0
        %v606 = vxor.u32 %v603, 2147483648
        %v607 = vmul.f32 %v606, 1.442695
        %v608 = vpow.pop %v607
        %v609 = vadd.f32 %v608, 1.0
        %v610 = vrcp.pop %v609
        %v611 = vmul.f32 1.0, %v610
        %613 = vrot.lane.b32.xlu0 %v611, 96
        %v614 = vpop.permute.xlu0 %613
        %v616 = vmul.f32 %v603, %v614
        %vm617 = vcmask 287744
        %618 = vst.msk [vmem:[#allocation2] sm:$0x3] %vm617, 0.0
        %619 = vst.msk [vmem:[#allocation2 + $0xa] sm:$0x3] %vm617, 0.0
        %vm620 = vcmask 15360
        %621 = vst.msk [vmem:[#allocation2] sm:$0xff] %vm620, 0.0
        %vm622 = vcmask 11264
        %623 = vst.msk [vmem:[#allocation2 + $0x8] sm:$0xf] %vm622, 0.0
        %vm624 = vcmask 294160
        %625 = vst.msk [vmem:[#allocation2] sm:$0xff] %vm624, 0.0
        %vm626 = vcmask 290064
        %627 = vst.msk [vmem:[#allocation2 + $0x8] sm:$0xf] %vm626, 0.0
        %629 = vrot.lane.b32.xlu0 %v616, 2
        %v630 = vpop.permute.xlu0 %629
        %vm632 = vcmask 277520
        %633 = vst.msk [vmem:[#allocation2 + $0x2] sm:$0xff] %vm632, %v630
        %v634 = vld [vmem:[#allocation11] sm:$0xff]
        %v635 = vld [vmem:[#allocation11 + $0x8] sm:$0xff]
        %v636 = vld [vmem:[#allocation11 + $0x10] sm:$0xff]
        %v637 = vld [vmem:[#allocation11 + $0x18] sm:$0xff]
        %v638 = vld [vmem:[#allocation12] sm:$0x1]
        %v640 = vlaneseq
        %v641 = vshrl.u32 %v640, 7
        %v642 = vsub.s32 0, %v641
        %v643 = vrot.slane %v638, %v642
        %v645 = vsel %vm532, %v616, 0
        %647 = vmatprep.subr.mxu0 0.0
        %648 = vmatpush1.msra.mxu0 %v634
        %649 = vmatprep.subr.mxu0 0.0
        %650 = vmatpush1.msra.mxu0 %v635
        %651 = vmatprep.subr.mxu0 0.0
        %652 = vmatpush1.msra.mxu0 %v636
        %653 = vmatprep.subr.mxu0 0.0
        %654 = vmatpush1.msra.mxu0 %v637
        %655 = vmatprep.subr.mxu0 0.0
        %656 = vmatpush1.msra.mxu0 0.0
        %657 = vmatprep.subr.mxu0 0.0
        %658 = vmatpush1.msra.mxu0 0.0
        %659 = vmatprep.subr.mxu0 0.0
        %660 = vmatpush1.msra.mxu0 0.0
        %661 = vmatprep.subr.mxu0 0.0
        %662 = vmatpush1.msra.mxu0 0.0
        %663 = vmatprep.subr.mxu0 0.0
        %664 = vmatpush1.msra.mxu0 0.0
        %665 = vmatprep.subr.mxu0 0.0
        %666 = vmatpush1.msra.mxu0 0.0
        %667 = vmatprep.subr.mxu0 0.0
        %668 = vmatpush1.msra.mxu0 0.0
        %669 = vmatprep.subr.mxu0 0.0
        %670 = vmatpush1.msra.mxu0 0.0
        %671 = vmatprep.subr.mxu0 0.0
        %672 = vmatpush1.msra.mxu0 0.0
        %673 = vmatprep.subr.mxu0 0.0
        %674 = vmatpush1.msra.mxu0 0.0
        %675 = vmatprep.subr.mxu0 0.0
        %676 = vmatpush1.msra.mxu0 0.0
        %677 = vmatprep.subr.mxu0 0.0
        %678 = vmatpush1.msra.mxu0 0.0
        %679 = vmatprep.subr.mxu0 0.0
        %680 = vmatpush1.msra.mxu0 0.0
        %681 = vmatprep.subr.mxu0 0.0
        %682 = vmatpush1.msra.mxu0 0.0
        %683 = vmatprep.subr.mxu0 0.0
        %684 = vmatpush1.msra.mxu0 0.0
        %685 = vmatprep.subr.mxu0 0.0
        %686 = vmatpush1.msra.mxu0 0.0
        %687 = vmatprep.subr.mxu0 0.0
        %688 = vmatpush1.msra.mxu0 0.0
        %689 = vmatprep.subr.mxu0 0.0
        %690 = vmatpush1.msra.mxu0 0.0
        %691 = vmatprep.subr.mxu0 0.0
        %692 = vmatpush1.msra.mxu0 0.0
        %693 = vmatprep.subr.mxu0 0.0
        %694 = vmatpush1.msra.mxu0 0.0
        %695 = vmatprep.subr.mxu0 0.0
        %696 = vmatpush1.msra.mxu0 0.0
        %697 = vmatprep.subr.mxu0 0.0
        %698 = vmatpush1.msra.mxu0 0.0
        %699 = vmatprep.subr.mxu0 0.0
        %700 = vmatpush1.msra.mxu0 0.0
        %701 = vmatprep.subr.mxu0 0.0
        %702 = vmatpush1.msra.mxu0 0.0
        %703 = vmatprep.subr.mxu0 0.0
        %704 = vmatpush1.msra.mxu0 0.0
        %705 = vmatprep.subr.mxu0 0.0
        %706 = vmatpush1.msra.mxu0 0.0
        %707 = vmatprep.subr.mxu0 0.0
        %708 = vmatpush1.msra.mxu0 0.0
        %709 = vmatprep.subr.mxu0 0.0
        %710 = vmatpush1.msra.mxu0 0.0
        %711 = vmatprep.mubr.f32.mxu0 0.0
        %712 = vmatmul.mubr.f32.gmra.mrb[0].mxu0 %v645
        %v713 = vpop.f32.mrb[0].mxu0
        %v714 = vadd.f32 %v643, %v713
        %v715 = vpop.f32.mrb[0].mxu0
        %716 = vdwg.mxu0
        %718 = vrot.lane.b32.xlu0 %v714, 124
        %v719 = vpop.permute.xlu0 %718
        %v721 = vmax.f32 %v714, %v719
        %722 = vrot.lane.b32.xlu0 %v714, 120
        %v723 = vpop.permute.xlu0 %722
        %v725 = vmax.f32 %v721, %v723
        %726 = vrot.lane.b32.xlu0 %v714, 116
        %v727 = vpop.permute.xlu0 %726
        %v729 = vmax.f32 %v725, %v727
        %730 = vrot.lane.b32.xlu0 %v714, 112
        %v731 = vpop.permute.xlu0 %730
        %v733 = vmax.f32 %v729, %v731
        %v734 = vlaneseq
        %v735 = vshrl.u32 %v734, 7
        %v736 = vsub.f32 %v714, %v733
        %v737 = vmul.f32 %v736, 1.442695
        %v738 = vpow.pop %v737
        %vm739 = vcmp.ge.s32.totalorder %v735, 2
        %vm740 = vcmp.lt.s32.totalorder %v735, 10
        %vm741 = vmand %vm739, %vm740
        %v742 = vsel %vm741, 1, 0
        %v743 = vcvt.s32.f32 %v742
        %v744 = vmul.f32 %v738, %v743
        %v745 = vadd.f32 %v744, 0.0
        %747 = vrot.lane.b32.xlu0 %v733, 4
        %v748 = vpop.permute.xlu0 %747
        %v750 = vsub.f32 %v714, %v748
        %v751 = vmul.f32 %v750, 1.442695
        %v752 = vpow.pop %v751
        %vm753 = vcmp.ge.s32.totalorder %v735, 1
        %vm754 = vcmp.lt.s32.totalorder %v735, 9
        %vm755 = vmand %vm753, %vm754
        %v756 = vsel %vm755, 1, 0
        %v757 = vcvt.s32.f32 %v756
        %v758 = vmul.f32 %v752, %v757
        %760 = vrot.lane.b32.xlu0 %v758, 124
        %v761 = vpop.permute.xlu0 %760
        %v763 = vadd.f32 %v745, %v761
        %764 = vrot.lane.b32.xlu0 %v733, 8
        %v765 = vpop.permute.xlu0 %764
        %v767 = vsub.f32 %v714, %v765
        %v768 = vmul.f32 %v767, 1.442695
        %v769 = vpow.pop %v768
        %771 = vrot.lane.b32.xlu0 %v769, 120
        %v772 = vpop.permute.xlu0 %771
        %v774 = vadd.f32 %v763, %v772
        %775 = vrot.lane.b32.xlu0 %v733, 12
        %v776 = vpop.permute.xlu0 %775
        %v778 = vsub.f32 %v714, %v776
        %v779 = vmul.f32 %v778, 1.442695
        %v780 = vpow.pop %v779
        %vm781 = vcmp.ge.s32.totalorder %v735, 4294967295
        %vm782 = vcmp.lt.s32.totalorder %v735, 7
        %vm783 = vmand %vm781, %vm782
        %v784 = vsel %vm783, 1, 0
        %v785 = vcvt.s32.f32 %v784
        %v786 = vmul.f32 %v780, %v785
        %788 = vrot.lane.b32.xlu0 %v786, 116
        %v789 = vpop.permute.xlu0 %788
        %v791 = vadd.f32 %v774, %v789
        %792 = vrot.lane.b32.xlu0 %v733, 16
        %v793 = vpop.permute.xlu0 %792
        %v795 = vsub.f32 %v714, %v793
        %v796 = vmul.f32 %v795, 1.442695
        %v797 = vpow.pop %v796
        %vm798 = vcmp.ge.s32.totalorder %v735, 4294967294
        %vm799 = vcmp.lt.s32.totalorder %v735, 6
        %vm800 = vmand %vm798, %vm799
        %v801 = vsel %vm800, 1, 0
        %v802 = vcvt.s32.f32 %v801
        %v803 = vmul.f32 %v797, %v802
        %805 = vrot.lane.b32.xlu0 %v803, 112
        %v806 = vpop.permute.xlu0 %805
        %v808 = vadd.f32 %v791, %v806
        %v809 = vrcp.pop %v808
        %v810 = vld [vmem:[#allocation14] sm:$0xf]
        %v811 = vmul.f32 %v744, %v809
        %813 = vrot.lane.b32.xlu0 %v811, 123
        %v814 = vpop.permute.xlu0 %813
        %vm815 = vcmask 31744
        %v816 = vsel %vm815, %v814, 0
        %vm818 = vcmask 1043456
        %v820 = vsel %vm818, %v810, 0
        %822 = vmatprep.subr.mxu0 0.0
        %823 = vmatpush1.msra.mxu0 %v820
        %824 = vmatprep.subr.mxu0 0.0
        %825 = vmatpush1.msra.mxu0 0.0
        %826 = vmatprep.subr.mxu0 0.0
        %827 = vmatpush1.msra.mxu0 0.0
        %828 = vmatprep.subr.mxu0 0.0
        %829 = vmatpush1.msra.mxu0 0.0
        %830 = vmatprep.subr.mxu0 0.0
        %831 = vmatpush1.msra.mxu0 0.0
        %832 = vmatprep.subr.mxu0 0.0
        %833 = vmatpush1.msra.mxu0 0.0
        %834 = vmatprep.subr.mxu0 0.0
        %835 = vmatpush1.msra.mxu0 0.0
        %836 = vmatprep.subr.mxu0 0.0
        %837 = vmatpush1.msra.mxu0 0.0
        %838 = vmatprep.subr.mxu0 0.0
        %839 = vmatpush1.msra.mxu0 0.0
        %840 = vmatprep.subr.mxu0 0.0
        %841 = vmatpush1.msra.mxu0 0.0
        %842 = vmatprep.subr.mxu0 0.0
        %843 = vmatpush1.msra.mxu0 0.0
        %844 = vmatprep.subr.mxu0 0.0
        %845 = vmatpush1.msra.mxu0 0.0
        %846 = vmatprep.subr.mxu0 0.0
        %847 = vmatpush1.msra.mxu0 0.0
        %848 = vmatprep.subr.mxu0 0.0
        %849 = vmatpush1.msra.mxu0 0.0
        %850 = vmatprep.subr.mxu0 0.0
        %851 = vmatpush1.msra.mxu0 0.0
        %852 = vmatprep.subr.mxu0 0.0
        %853 = vmatpush1.msra.mxu0 0.0
        %854 = vmatprep.subr.mxu0 0.0
        %855 = vmatpush1.msra.mxu0 0.0
        %856 = vmatprep.subr.mxu0 0.0
        %857 = vmatpush1.msra.mxu0 0.0
        %858 = vmatprep.subr.mxu0 0.0
        %859 = vmatpush1.msra.mxu0 0.0
        %860 = vmatprep.subr.mxu0 0.0
        %861 = vmatpush1.msra.mxu0 0.0
        %862 = vmatprep.subr.mxu0 0.0
        %863 = vmatpush1.msra.mxu0 0.0
        %864 = vmatprep.subr.mxu0 0.0
        %865 = vmatpush1.msra.mxu0 0.0
        %866 = vmatprep.subr.mxu0 0.0
        %867 = vmatpush1.msra.mxu0 0.0
        %868 = vmatprep.subr.mxu0 0.0
        %869 = vmatpush1.msra.mxu0 0.0
        %870 = vmatprep.subr.mxu0 0.0
        %871 = vmatpush1.msra.mxu0 0.0
        %872 = vmatprep.subr.mxu0 0.0
        %873 = vmatpush1.msra.mxu0 0.0
        %874 = vmatprep.subr.mxu0 0.0
        %875 = vmatpush1.msra.mxu0 0.0
        %876 = vmatprep.subr.mxu0 0.0
        %877 = vmatpush1.msra.mxu0 0.0
        %878 = vmatprep.subr.mxu0 0.0
        %879 = vmatpush1.msra.mxu0 0.0
        %880 = vmatprep.subr.mxu0 0.0
        %881 = vmatpush1.msra.mxu0 0.0
        %882 = vmatprep.subr.mxu0 0.0
        %883 = vmatpush1.msra.mxu0 0.0
        %884 = vmatprep.subr.mxu0 0.0
        %885 = vmatpush1.msra.mxu0 0.0
        %886 = vmatprep.mubr.f32.mxu0 0.0
        %887 = vmatmul.mubr.f32.gmra.mrb[0].mxu0 %v816
        %v888 = vpop.f32.mrb[0].mxu0
        %v889 = vadd.f32 0.0, %v888
        %v890 = vpop.f32.mrb[0].mxu0
        %891 = vdwg.mxu0
        %v892 = vld [vmem:[#allocation2] sm:$0xff]
        %894 = vrot.lane.b32.xlu0 %v892, 126
        %v895 = vpop.permute.xlu0 %894
        %v897 = vmul.f32 %v889, %v895
        %v898 = vadd.f32 %v897, 0.0
        %900 = vrot.lane.b32.xlu0 %v809, 4
        %v901 = vpop.permute.xlu0 %900
        %v903 = vmul.f32 %v758, %v901
        %905 = vrot.lane.b32.xlu0 %v903, 119
        %v906 = vpop.permute.xlu0 %905
        %v907 = vsel %vm815, %v906, 0
        %909 = vmatprep.subr.mxu0 0.0
        %910 = vmatpush1.msra.mxu0 %v820
        %911 = vmatprep.subr.mxu0 0.0
        %912 = vmatpush1.msra.mxu0 0.0
        %913 = vmatprep.subr.mxu0 0.0
        %914 = vmatpush1.msra.mxu0 0.0
        %915 = vmatprep.subr.mxu0 0.0
        %916 = vmatpush1.msra.mxu0 0.0
        %917 = vmatprep.subr.mxu0 0.0
        %918 = vmatpush1.msra.mxu0 0.0
        %919 = vmatprep.subr.mxu0 0.0
        %920 = vmatpush1.msra.mxu0 0.0
        %921 = vmatprep.subr.mxu0 0.0
        %922 = vmatpush1.msra.mxu0 0.0
        %923 = vmatprep.subr.mxu0 0.0
        %924 = vmatpush1.msra.mxu0 0.0
        %925 = vmatprep.subr.mxu0 0.0
        %926 = vmatpush1.msra.mxu0 0.0
        %927 = vmatprep.subr.mxu0 0.0
        %928 = vmatpush1.msra.mxu0 0.0
        %929 = vmatprep.subr.mxu0 0.0
        %930 = vmatpush1.msra.mxu0 0.0
        %931 = vmatprep.subr.mxu0 0.0
        %932 = vmatpush1.msra.mxu0 0.0
        %933 = vmatprep.subr.mxu0 0.0
        %934 = vmatpush1.msra.mxu0 0.0
        %935 = vmatprep.subr.mxu0 0.0
        %936 = vmatpush1.msra.mxu0 0.0
        %937 = vmatprep.subr.mxu0 0.0
        %938 = vmatpush1.msra.mxu0 0.0
        %939 = vmatprep.subr.mxu0 0.0
        %940 = vmatpush1.msra.mxu0 0.0
        %941 = vmatprep.subr.mxu0 0.0
        %942 = vmatpush1.msra.mxu0 0.0
        %943 = vmatprep.subr.mxu0 0.0
        %944 = vmatpush1.msra.mxu0 0.0
        %945 = vmatprep.subr.mxu0 0.0
        %946 = vmatpush1.msra.mxu0 0.0
        %947 = vmatprep.subr.mxu0 0.0
        %948 = vmatpush1.msra.mxu0 0.0
        %949 = vmatprep.subr.mxu0 0.0
        %950 = vmatpush1.msra.mxu0 0.0
        %951 = vmatprep.subr.mxu0 0.0
        %952 = vmatpush1.msra.mxu0 0.0
        %953 = vmatprep.subr.mxu0 0.0
        %954 = vmatpush1.msra.mxu0 0.0
        %955 = vmatprep.subr.mxu0 0.0
        %956 = vmatpush1.msra.mxu0 0.0
        %957 = vmatprep.subr.mxu0 0.0
        %958 = vmatpush1.msra.mxu0 0.0
        %959 = vmatprep.subr.mxu0 0.0
        %960 = vmatpush1.msra.mxu0 0.0
        %961 = vmatprep.subr.mxu0 0.0
        %962 = vmatpush1.msra.mxu0 0.0
        %963 = vmatprep.subr.mxu0 0.0
        %964 = vmatpush1.msra.mxu0 0.0
        %965 = vmatprep.subr.mxu0 0.0
        %966 = vmatpush1.msra.mxu0 0.0
        %967 = vmatprep.subr.mxu0 0.0
        %968 = vmatpush1.msra.mxu0 0.0
        %969 = vmatprep.subr.mxu0 0.0
        %970 = vmatpush1.msra.mxu0 0.0
        %971 = vmatprep.subr.mxu0 0.0
        %972 = vmatpush1.msra.mxu0 0.0
        %973 = vmatprep.mubr.f32.mxu0 0.0
        %974 = vmatmul.mubr.f32.gmra.mrb[0].mxu0 %v907
        %v975 = vpop.f32.mrb[0].mxu0
        %v976 = vadd.f32 0.0, %v975
        %v977 = vpop.f32.mrb[0].mxu0
        %978 = vdwg.mxu0
        %v979 = vld [vmem:[#allocation2 + $0x1] sm:$0xff]
        %981 = vrot.lane.b32.xlu0 %v979, 126
        %v982 = vpop.permute.xlu0 %981
        %v984 = vmul.f32 %v976, %v982
        %v985 = vadd.f32 %v898, %v984
        %986 = vrot.lane.b32.xlu0 %v809, 8
        %v987 = vpop.permute.xlu0 %986
        %v989 = vmul.f32 %v769, %v987
        %991 = vrot.lane.b32.xlu0 %v989, 115
        %v992 = vpop.permute.xlu0 %991
        %v993 = vsel %vm815, %v992, 0
        %995 = vmatprep.subr.mxu0 0.0
        %996 = vmatpush1.msra.mxu0 %v820
        %997 = vmatprep.subr.mxu0 0.0
        %998 = vmatpush1.msra.mxu0 0.0
        %999 = vmatprep.subr.mxu0 0.0
        %1000 = vmatpush1.msra.mxu0 0.0
        %1001 = vmatprep.subr.mxu0 0.0
        %1002 = vmatpush1.msra.mxu0 0.0
        %1003 = vmatprep.subr.mxu0 0.0
        %1004 = vmatpush1.msra.mxu0 0.0
        %1005 = vmatprep.subr.mxu0 0.0
        %1006 = vmatpush1.msra.mxu0 0.0
        %1007 = vmatprep.subr.mxu0 0.0
        %1008 = vmatpush1.msra.mxu0 0.0
        %1009 = vmatprep.subr.mxu0 0.0
        %1010 = vmatpush1.msra.mxu0 0.0
        %1011 = vmatprep.subr.mxu0 0.0
        %1012 = vmatpush1.msra.mxu0 0.0
        %1013 = vmatprep.subr.mxu0 0.0
        %1014 = vmatpush1.msra.mxu0 0.0
        %1015 = vmatprep.subr.mxu0 0.0
        %1016 = vmatpush1.msra.mxu0 0.0
        %1017 = vmatprep.subr.mxu0 0.0
        %1018 = vmatpush1.msra.mxu0 0.0
        %1019 = vmatprep.subr.mxu0 0.0
        %1020 = vmatpush1.msra.mxu0 0.0
        %1021 = vmatprep.subr.mxu0 0.0
        %1022 = vmatpush1.msra.mxu0 0.0
        %1023 = vmatprep.subr.mxu0 0.0
        %1024 = vmatpush1.msra.mxu0 0.0
        %1025 = vmatprep.subr.mxu0 0.0
        %1026 = vmatpush1.msra.mxu0 0.0
        %1027 = vmatprep.subr.mxu0 0.0
        %1028 = vmatpush1.msra.mxu0 0.0
        %1029 = vmatprep.subr.mxu0 0.0
        %1030 = vmatpush1.msra.mxu0 0.0
        %1031 = vmatprep.subr.mxu0 0.0
        %1032 = vmatpush1.msra.mxu0 0.0
        %1033 = vmatprep.subr.mxu0 0.0
        %1034 = vmatpush1.msra.mxu0 0.0
        %1035 = vmatprep.subr.mxu0 0.0
        %1036 = vmatpush1.msra.mxu0 0.0
        %1037 = vmatprep.subr.mxu0 0.0
        %1038 = vmatpush1.msra.mxu0 0.0
        %1039 = vmatprep.subr.mxu0 0.0
        %1040 = vmatpush1.msra.mxu0 0.0
        %1041 = vmatprep.subr.mxu0 0.0
        %1042 = vmatpush1.msra.mxu0 0.0
        %1043 = vmatprep.subr.mxu0 0.0
        %1044 = vmatpush1.msra.mxu0 0.0
        %1045 = vmatprep.subr.mxu0 0.0
        %1046 = vmatpush1.msra.mxu0 0.0
        %1047 = vmatprep.subr.mxu0 0.0
        %1048 = vmatpush1.msra.mxu0 0.0
        %1049 = vmatprep.subr.mxu0 0.0
        %1050 = vmatpush1.msra.mxu0 0.0
        %1051 = vmatprep.subr.mxu0 0.0
        %1052 = vmatpush1.msra.mxu0 0.0
        %1053 = vmatprep.subr.mxu0 0.0
        %1054 = vmatpush1.msra.mxu0 0.0
        %1055 = vmatprep.subr.mxu0 0.0
        %1056 = vmatpush1.msra.mxu0 0.0
        %1057 = vmatprep.subr.mxu0 0.0
        %1058 = vmatpush1.msra.mxu0 0.0
        %1059 = vmatprep.mubr.f32.mxu0 0.0
        %1060 = vmatmul.mubr.f32.gmra.mrb[0].mxu0 %v993
        %v1061 = vpop.f32.mrb[0].mxu0
        %v1062 = vadd.f32 0.0, %v1061
        %v1063 = vpop.f32.mrb[0].mxu0
        %1064 = vdwg.mxu0
        %v1065 = vld [vmem:[#allocation2 + $0x2] sm:$0xff]
        %1067 = vrot.lane.b32.xlu0 %v1065, 126
        %v1068 = vpop.permute.xlu0 %1067
        %v1070 = vmul.f32 %v1062, %v1068
        %v1071 = vadd.f32 %v985, %v1070
        %1072 = vrot.lane.b32.xlu0 %v809, 12
        %v1073 = vpop.permute.xlu0 %1072
        %v1075 = vmul.f32 %v786, %v1073
        %1077 = vrot.lane.b32.xlu0 %v1075, 111
        %v1078 = vpop.permute.xlu0 %1077
        %v1079 = vsel %vm815, %v1078, 0
        %1081 = vmatprep.subr.mxu0 0.0
        %1082 = vmatpush1.msra.mxu0 %v820
        %1083 = vmatprep.subr.mxu0 0.0
        %1084 = vmatpush1.msra.mxu0 0.0
        %1085 = vmatprep.subr.mxu0 0.0
        %1086 = vmatpush1.msra.mxu0 0.0
        %1087 = vmatprep.subr.mxu0 0.0
        %1088 = vmatpush1.msra.mxu0 0.0
        %1089 = vmatprep.subr.mxu0 0.0
        %1090 = vmatpush1.msra.mxu0 0.0
        %1091 = vmatprep.subr.mxu0 0.0
        %1092 = vmatpush1.msra.mxu0 0.0
        %1093 = vmatprep.subr.mxu0 0.0
        %1094 = vmatpush1.msra.mxu0 0.0
        %1095 = vmatprep.subr.mxu0 0.0
        %1096 = vmatpush1.msra.mxu0 0.0
        %1097 = vmatprep.subr.mxu0 0.0
        %1098 = vmatpush1.msra.mxu0 0.0
        %1099 = vmatprep.subr.mxu0 0.0
        %1100 = vmatpush1.msra.mxu0 0.0
        %1101 = vmatprep.subr.mxu0 0.0
        %1102 = vmatpush1.msra.mxu0 0.0
        %1103 = vmatprep.subr.mxu0 0.0
        %1104 = vmatpush1.msra.mxu0 0.0
        %1105 = vmatprep.subr.mxu0 0.0
        %1106 = vmatpush1.msra.mxu0 0.0
        %1107 = vmatprep.subr.mxu0 0.0
        %1108 = vmatpush1.msra.mxu0 0.0
        %1109 = vmatprep.subr.mxu0 0.0
        %1110 = vmatpush1.msra.mxu0 0.0
        %1111 = vmatprep.subr.mxu0 0.0
        %1112 = vmatpush1.msra.mxu0 0.0
        %1113 = vmatprep.subr.mxu0 0.0
        %1114 = vmatpush1.msra.mxu0 0.0
        %1115 = vmatprep.subr.mxu0 0.0
        %1116 = vmatpush1.msra.mxu0 0.0
        %1117 = vmatprep.subr.mxu0 0.0
        %1118 = vmatpush1.msra.mxu0 0.0
        %1119 = vmatprep.subr.mxu0 0.0
        %1120 = vmatpush1.msra.mxu0 0.0
        %1121 = vmatprep.subr.mxu0 0.0
        %1122 = vmatpush1.msra.mxu0 0.0
        %1123 = vmatprep.subr.mxu0 0.0
        %1124 = vmatpush1.msra.mxu0 0.0
        %1125 = vmatprep.subr.mxu0 0.0
        %1126 = vmatpush1.msra.mxu0 0.0
        %1127 = vmatprep.subr.mxu0 0.0
        %1128 = vmatpush1.msra.mxu0 0.0
        %1129 = vmatprep.subr.mxu0 0.0
        %1130 = vmatpush1.msra.mxu0 0.0
        %1131 = vmatprep.subr.mxu0 0.0
        %1132 = vmatpush1.msra.mxu0 0.0
        %1133 = vmatprep.subr.mxu0 0.0
        %1134 = vmatpush1.msra.mxu0 0.0
        %1135 = vmatprep.subr.mxu0 0.0
        %1136 = vmatpush1.msra.mxu0 0.0
        %1137 = vmatprep.subr.mxu0 0.0
        %1138 = vmatpush1.msra.mxu0 0.0
        %1139 = vmatprep.subr.mxu0 0.0
        %1140 = vmatpush1.msra.mxu0 0.0
        %1141 = vmatprep.subr.mxu0 0.0
        %1142 = vmatpush1.msra.mxu0 0.0
        %1143 = vmatprep.subr.mxu0 0.0
        %1144 = vmatpush1.msra.mxu0 0.0
        %1145 = vmatprep.mubr.f32.mxu0 0.0
        %1146 = vmatmul.mubr.f32.gmra.mrb[0].mxu0 %v1079
        %v1147 = vpop.f32.mrb[0].mxu0
        %v1148 = vadd.f32 0.0, %v1147
        %v1149 = vpop.f32.mrb[0].mxu0
        %1150 = vdwg.mxu0
        %v1151 = vld [vmem:[#allocation2 + $0x3] sm:$0xff]
        %1153 = vrot.lane.b32.xlu0 %v1151, 126
        %v1154 = vpop.permute.xlu0 %1153
        %v1156 = vmul.f32 %v1148, %v1154
        %v1157 = vadd.f32 %v1071, %v1156
        %1158 = vrot.lane.b32.xlu0 %v809, 16
        %v1159 = vpop.permute.xlu0 %1158
        %v1161 = vmul.f32 %v803, %v1159
        %1163 = vrot.lane.b32.xlu0 %v1161, 107
        %v1164 = vpop.permute.xlu0 %1163
        %v1165 = vsel %vm815, %v1164, 0
        %1167 = vmatprep.subr.mxu0 0.0
        %1168 = vmatpush1.msra.mxu0 %v820
        %1169 = vmatprep.subr.mxu0 0.0
        %1170 = vmatpush1.msra.mxu0 0.0
        %1171 = vmatprep.subr.mxu0 0.0
        %1172 = vmatpush1.msra.mxu0 0.0
        %1173 = vmatprep.subr.mxu0 0.0
        %1174 = vmatpush1.msra.mxu0 0.0
        %1175 = vmatprep.subr.mxu0 0.0
        %1176 = vmatpush1.msra.mxu0 0.0
        %1177 = vmatprep.subr.mxu0 0.0
        %1178 = vmatpush1.msra.mxu0 0.0
        %1179 = vmatprep.subr.mxu0 0.0
        %1180 = vmatpush1.msra.mxu0 0.0
        %1181 = vmatprep.subr.mxu0 0.0
        %1182 = vmatpush1.msra.mxu0 0.0
        %1183 = vmatprep.subr.mxu0 0.0
        %1184 = vmatpush1.msra.mxu0 0.0
        %1185 = vmatprep.subr.mxu0 0.0
        %1186 = vmatpush1.msra.mxu0 0.0
        %1187 = vmatprep.subr.mxu0 0.0
        %1188 = vmatpush1.msra.mxu0 0.0
        %1189 = vmatprep.subr.mxu0 0.0
        %1190 = vmatpush1.msra.mxu0 0.0
        %1191 = vmatprep.subr.mxu0 0.0
        %1192 = vmatpush1.msra.mxu0 0.0
        %1193 = vmatprep.subr.mxu0 0.0
        %1194 = vmatpush1.msra.mxu0 0.0
        %1195 = vmatprep.subr.mxu0 0.0
        %1196 = vmatpush1.msra.mxu0 0.0
        %1197 = vmatprep.subr.mxu0 0.0
        %1198 = vmatpush1.msra.mxu0 0.0
        %1199 = vmatprep.subr.mxu0 0.0
        %1200 = vmatpush1.msra.mxu0 0.0
        %1201 = vmatprep.subr.mxu0 0.0
        %1202 = vmatpush1.msra.mxu0 0.0
        %1203 = vmatprep.subr.mxu0 0.0
        %1204 = vmatpush1.msra.mxu0 0.0
        %1205 = vmatprep.subr.mxu0 0.0
        %1206 = vmatpush1.msra.mxu0 0.0
        %1207 = vmatprep.subr.mxu0 0.0
        %1208 = vmatpush1.msra.mxu0 0.0
        %1209 = vmatprep.subr.mxu0 0.0
        %1210 = vmatpush1.msra.mxu0 0.0
        %1211 = vmatprep.subr.mxu0 0.0
        %1212 = vmatpush1.msra.mxu0 0.0
        %1213 = vmatprep.subr.mxu0 0.0
        %1214 = vmatpush1.msra.mxu0 0.0
        %1215 = vmatprep.subr.mxu0 0.0
        %1216 = vmatpush1.msra.mxu0 0.0
        %1217 = vmatprep.subr.mxu0 0.0
        %1218 = vmatpush1.msra.mxu0 0.0
        %1219 = vmatprep.subr.mxu0 0.0
        %1220 = vmatpush1.msra.mxu0 0.0
        %1221 = vmatprep.subr.mxu0 0.0
        %1222 = vmatpush1.msra.mxu0 0.0
        %1223 = vmatprep.subr.mxu0 0.0
        %1224 = vmatpush1.msra.mxu0 0.0
        %1225 = vmatprep.subr.mxu0 0.0
        %1226 = vmatpush1.msra.mxu0 0.0
        %1227 = vmatprep.subr.mxu0 0.0
        %1228 = vmatpush1.msra.mxu0 0.0
        %1229 = vmatprep.subr.mxu0 0.0
        %1230 = vmatpush1.msra.mxu0 0.0
        %1231 = vmatprep.mubr.f32.mxu0 0.0
        %1232 = vmatmul.mubr.f32.gmra.mrb[0].mxu0 %v1165
        %v1233 = vpop.f32.mrb[0].mxu0
        %v1234 = vadd.f32 0.0, %v1233
        %v1235 = vpop.f32.mrb[0].mxu0
        %1236 = vdwg.mxu0
        %v1237 = vld [vmem:[#allocation2 + $0x4] sm:$0xff]
        %1239 = vrot.lane.b32.xlu0 %v1237, 126
        %v1240 = vpop.permute.xlu0 %1239
        %v1242 = vmul.f32 %v1234, %v1240
        %v1243 = vadd.f32 %v1157, %v1242
        %1244 = vset.pattern.permute.xlu0 0
        %1245 = vperm.xlu0 %1244, %v714
        %v1246 = vpop.permute.xlu0 %1245
        %v1248 = vmul.f32 %v1246, %v1065
        %v1249 = vadd.f32 %v1248, 0.0
        %1250 = vset.pattern.permute.xlu0 1
        %1251 = vperm.xlu0 %1250, %v714
        %v1252 = vpop.permute.xlu0 %1251
        %v1254 = vmul.f32 %v1252, %v1065
        %1256 = vrot.lane.b32.xlu0 %v1254, 127
        %v1257 = vpop.permute.xlu0 %1256
        %v1259 = vadd.f32 %v1249, %v1257
        %1260 = vset.pattern.permute.xlu0 2
        %1261 = vperm.xlu0 %1260, %v714
        %v1262 = vpop.permute.xlu0 %1261
        %v1264 = vmul.f32 %v1262, %v1065
        %1266 = vrot.lane.b32.xlu0 %v1264, 126
        %v1267 = vpop.permute.xlu0 %1266
        %v1269 = vadd.f32 %v1259, %v1267
        %1270 = vset.pattern.permute.xlu0 3
        %1271 = vperm.xlu0 %1270, %v714
        %v1272 = vpop.permute.xlu0 %1271
        %v1274 = vmul.f32 %v1272, %v1065
        %1276 = vrot.lane.b32.xlu0 %v1274, 125
        %v1277 = vpop.permute.xlu0 %1276
        %v1279 = vadd.f32 %v1269, %v1277
        %1280 = vset.pattern.permute.xlu0 4
        %1281 = vperm.xlu0 %1280, %v714
        %v1282 = vpop.permute.xlu0 %1281
        %v1284 = vmul.f32 %v1282, %v1065
        %1286 = vrot.lane.b32.xlu0 %v1284, 124
        %v1287 = vpop.permute.xlu0 %1286
        %v1289 = vadd.f32 %v1279, %v1287
        %v1290 = vld [vmem:[%s446] sm:$0xff]
        %1292 = vset.pattern.permute.xlu0 0
        %1293 = vperm.xlu0 %1292, %v1290
        %v1294 = vpop.permute.xlu0 %1293
        %v1296 = vmul.f32 %v1243, %v1294
        %v1297 = vmul.f32 %v1289, %v1294
        %v1298 = vld [vmem:[#allocation15] sm:$0xff]
        %v1299 = vld [vmem:[#allocation15 + $0x8] sm:$0xff]
        %v1300 = vld [vmem:[#allocation15 + $0x10] sm:$0xff]
        %v1301 = vld [vmem:[#allocation15 + $0x18] sm:$0xff]
        %v1302 = vld [vmem:[#allocation17] sm:$0xff]
        %v1303 = vld [vmem:[#allocation17 + $0x8] sm:$0xff]
        %v1304 = vld [vmem:[#allocation17 + $0x10] sm:$0xff]
        %v1305 = vld [vmem:[#allocation17 + $0x18] sm:$0xff]
        %v1307 = vsel %vm532, %v1297, 0
        %1309 = vmatprep.subr.mxu0 0.0
        %1310 = vmatpush1.msra.mxu0 %v1302
        %1311 = vmatprep.subr.mxu0 0.0
        %1312 = vmatpush1.msra.mxu0 %v1303
        %1313 = vmatprep.subr.mxu0 0.0
        %1314 = vmatpush1.msra.mxu0 %v1304
        %1315 = vmatprep.subr.mxu0 0.0
        %1316 = vmatpush1.msra.mxu0 %v1305
        %1317 = vmatprep.subr.mxu0 0.0
        %1318 = vmatpush1.msra.mxu0 0.0
        %1319 = vmatprep.subr.mxu0 0.0
        %1320 = vmatpush1.msra.mxu0 0.0
        %1321 = vmatprep.subr.mxu0 0.0
        %1322 = vmatpush1.msra.mxu0 0.0
        %1323 = vmatprep.subr.mxu0 0.0
        %1324 = vmatpush1.msra.mxu0 0.0
        %1325 = vmatprep.subr.mxu0 0.0
        %1326 = vmatpush1.msra.mxu0 0.0
        %1327 = vmatprep.subr.mxu0 0.0
        %1328 = vmatpush1.msra.mxu0 0.0
        %1329 = vmatprep.subr.mxu0 0.0
        %1330 = vmatpush1.msra.mxu0 0.0
        %1331 = vmatprep.subr.mxu0 0.0
        %1332 = vmatpush1.msra.mxu0 0.0
        %1333 = vmatprep.subr.mxu0 0.0
        %1334 = vmatpush1.msra.mxu0 0.0
        %1335 = vmatprep.subr.mxu0 0.0
        %1336 = vmatpush1.msra.mxu0 0.0
        %1337 = vmatprep.subr.mxu0 0.0
        %1338 = vmatpush1.msra.mxu0 0.0
        %1339 = vmatprep.subr.mxu0 0.0
        %1340 = vmatpush1.msra.mxu0 0.0
        %1341 = vmatprep.subr.mxu0 0.0
        %1342 = vmatpush1.msra.mxu0 0.0
        %1343 = vmatprep.subr.mxu0 0.0
        %1344 = vmatpush1.msra.mxu0 0.0
        %1345 = vmatprep.subr.mxu0 0.0
        %1346 = vmatpush1.msra.mxu0 0.0
        %1347 = vmatprep.subr.mxu0 0.0
        %1348 = vmatpush1.msra.mxu0 0.0
        %1349 = vmatprep.subr.mxu0 0.0
        %1350 = vmatpush1.msra.mxu0 0.0
        %1351 = vmatprep.subr.mxu0 0.0
        %1352 = vmatpush1.msra.mxu0 0.0
        %1353 = vmatprep.subr.mxu0 0.0
        %1354 = vmatpush1.msra.mxu0 0.0
        %1355 = vmatprep.subr.mxu0 0.0
        %1356 = vmatpush1.msra.mxu0 0.0
        %1357 = vmatprep.subr.mxu0 0.0
        %1358 = vmatpush1.msra.mxu0 0.0
        %1359 = vmatprep.subr.mxu0 0.0
        %1360 = vmatpush1.msra.mxu0 0.0
        %1361 = vmatprep.subr.mxu0 0.0
        %1362 = vmatpush1.msra.mxu0 0.0
        %1363 = vmatprep.subr.mxu0 0.0
        %1364 = vmatpush1.msra.mxu0 0.0
        %1365 = vmatprep.subr.mxu0 0.0
        %1366 = vmatpush1.msra.mxu0 0.0
        %1367 = vmatprep.subr.mxu0 0.0
        %1368 = vmatpush1.msra.mxu0 0.0
        %1369 = vmatprep.subr.mxu0 0.0
        %1370 = vmatpush1.msra.mxu0 0.0
        %1371 = vmatprep.subr.mxu0 0.0
        %1372 = vmatpush1.msra.mxu0 0.0
        %1373 = vmatprep.mubr.f32.mxu0 0.0
        %1374 = vmatmul.mubr.f32.gmra.mrb[0].mxu0 %v1307
        %v1375 = vpop.f32.mrb[0].mxu0
        %v1376 = vadd.f32 0.0, %v1375
        %v1377 = vpop.f32.mrb[0].mxu0
        %1378 = vdwg.mxu0
        %v1380 = vsel %vm532, %v1296, 0
        %1382 = vmatprep.subr.mxu0 0.0
        %1383 = vmatpush1.msra.mxu0 %v1298
        %1384 = vmatprep.subr.mxu0 0.0
        %1385 = vmatpush1.msra.mxu0 %v1299
        %1386 = vmatprep.subr.mxu0 0.0
        %1387 = vmatpush1.msra.mxu0 %v1300
        %1388 = vmatprep.subr.mxu0 0.0
        %1389 = vmatpush1.msra.mxu0 %v1301
        %1390 = vmatprep.subr.mxu0 0.0
        %1391 = vmatpush1.msra.mxu0 0.0
        %1392 = vmatprep.subr.mxu0 0.0
        %1393 = vmatpush1.msra.mxu0 0.0
        %1394 = vmatprep.subr.mxu0 0.0
        %1395 = vmatpush1.msra.mxu0 0.0
        %1396 = vmatprep.subr.mxu0 0.0
        %1397 = vmatpush1.msra.mxu0 0.0
        %1398 = vmatprep.subr.mxu0 0.0
        %1399 = vmatpush1.msra.mxu0 0.0
        %1400 = vmatprep.subr.mxu0 0.0
        %1401 = vmatpush1.msra.mxu0 0.0
        %1402 = vmatprep.subr.mxu0 0.0
        %1403 = vmatpush1.msra.mxu0 0.0
        %1404 = vmatprep.subr.mxu0 0.0
        %1405 = vmatpush1.msra.mxu0 0.0
        %1406 = vmatprep.subr.mxu0 0.0
        %1407 = vmatpush1.msra.mxu0 0.0
        %1408 = vmatprep.subr.mxu0 0.0
        %1409 = vmatpush1.msra.mxu0 0.0
        %1410 = vmatprep.subr.mxu0 0.0
        %1411 = vmatpush1.msra.mxu0 0.0
        %1412 = vmatprep.subr.mxu0 0.0
        %1413 = vmatpush1.msra.mxu0 0.0
        %1414 = vmatprep.subr.mxu0 0.0
        %1415 = vmatpush1.msra.mxu0 0.0
        %1416 = vmatprep.subr.mxu0 0.0
        %1417 = vmatpush1.msra.mxu0 0.0
        %1418 = vmatprep.subr.mxu0 0.0
        %1419 = vmatpush1.msra.mxu0 0.0
        %1420 = vmatprep.subr.mxu0 0.0
        %1421 = vmatpush1.msra.mxu0 0.0
        %1422 = vmatprep.subr.mxu0 0.0
        %1423 = vmatpush1.msra.mxu0 0.0
        %1424 = vmatprep.subr.mxu0 0.0
        %1425 = vmatpush1.msra.mxu0 0.0
        %1426 = vmatprep.subr.mxu0 0.0
        %1427 = vmatpush1.msra.mxu0 0.0
        %1428 = vmatprep.subr.mxu0 0.0
        %1429 = vmatpush1.msra.mxu0 0.0
        %1430 = vmatprep.subr.mxu0 0.0
        %1431 = vmatpush1.msra.mxu0 0.0
        %1432 = vmatprep.subr.mxu0 0.0
        %1433 = vmatpush1.msra.mxu0 0.0
        %1434 = vmatprep.subr.mxu0 0.0
        %1435 = vmatpush1.msra.mxu0 0.0
        %1436 = vmatprep.subr.mxu0 0.0
        %1437 = vmatpush1.msra.mxu0 0.0
        %1438 = vmatprep.subr.mxu0 0.0
        %1439 = vmatpush1.msra.mxu0 0.0
        %1440 = vmatprep.subr.mxu0 0.0
        %1441 = vmatpush1.msra.mxu0 0.0
        %1442 = vmatprep.subr.mxu0 0.0
        %1443 = vmatpush1.msra.mxu0 0.0
        %1444 = vmatprep.subr.mxu0 0.0
        %1445 = vmatpush1.msra.mxu0 0.0
        %1446 = vmatprep.mubr.f32.mxu0 0.0
        %1447 = vmatmul.mubr.f32.gmra.mrb[0].mxu0 %v1380
        %v1448 = vpop.f32.mrb[0].mxu0
        %v1449 = vadd.f32 %v1376, %v1448
        %v1450 = vpop.f32.mrb[0].mxu0
        %1451 = vdwg.mxu0
        %v1452 = vld [vmem:[#allocation18] sm:$0x1]
        %v1454 = vlaneseq
        %v1455 = vshrl.u32 %v1454, 7
        %v1456 = vsub.s32 0, %v1455
        %v1457 = vrot.slane %v1452, %v1456
        %v1459 = vadd.f32 %v1449, %v1457
        %1460 = vst.msk [vmem:[%s519] sm:$0xff] %vm532, %v1459
        %s1461 = sand.u32 %s262, 1
        %s1462 = scalar_lea.sflag [#allocation5], %s1461
        %s1463 = sand.u32 %s262, 1
        %s1464 = smul.addr %s1463, 8
        %s1465 = scalar_lea.vmem [#allocation20], %s1464
        // Predicated region
        $region101: #{tpu_custom_call.1} parent=59 // pred_check
          %p1466 = pneg %p272
        $region102: #{tpu_custom_call.1} parent=59 // pred_check_branch
          %1468 = sbr.rel (%p1466) target = $region104
        $region103: #{tpu_custom_call.1} parent=59 // pred_region
          %s1470 = ssub.s32 128, 128
          %1471 = vsyncadd %s1462, %s1470
          %s1472 = smul.addr %s34, 128
          %s1473 = scalar_lea.hbm %s10, %s1472
          %s1475 = sshll.u32 %s1465, 4
          %s1476 = int_to_ptr.vmem [resolvable:$true] %s1475
          %1478 = dma.vmem_to_hbm [thread:$0]  %s1476, 128, %s1473, %s1462
        $region104: #{tpu_custom_call.1} parent=59 // pred_fallthru
          _
      $region60: #{tpu_custom_call.1} parent=5 // pred_fallthru
        _
      %p1479 = scmp.le.s32.totalorder 2, %s29
      // Predicated region
      $region105: #{tpu_custom_call.1} parent=5 // pred_check
        %p1480 = pneg %p1479
      $region106: #{tpu_custom_call.1} parent=5 // pred_check_branch
        %1482 = sbr.rel (%p1480) target = $region108
      $region107: #{tpu_custom_call.1} parent=5 // pred_region
        %s1483 = ssub.s32 %s29, 2
        // Predicated region
        $region109: #{tpu_custom_call.1} parent=107 // pred_check
          %p1484 = pneg %p278
        $region110: #{tpu_custom_call.1} parent=107 // pred_check_branch
          %1486 = sbr.rel (%p1484) target = $region112
        $region111: #{tpu_custom_call.1} parent=107 // pred_region
          %s1487 = sand.u32 %s263, 1
          %s1488 = scalar_lea.sflag [#allocation5], %s1487
          %s1489 = sand.u32 %s263, 1
          %s1490 = smul.addr %s1489, 8
          %s1491 = scalar_lea.vmem [#allocation20], %s1490
          %1492 = dma.done %s1488, 128
        $region112: #{tpu_custom_call.1} parent=107 // pred_fallthru
          _
      $region108: #{tpu_custom_call.1} parent=5 // pred_fallthru
        _
    $region6: #{tpu_custom_call.1} parent=1 // loop_footer
      %s33 = sadd.s32 1, %s29
    $region7: #{tpu_custom_call.1} parent=1 // loop_footer_branch
      %28 = sbr.rel target = $region3
    $region8: #{tpu_custom_call.1} parent=1 // loop_exit
      _
    %1493 = vsyncpa [#allocation4], 1
    %s1494 = scalar_lea.sflag [#allocation4], 1
    %1495 = vsyncpa %s1494, 1
    %1496 = vsyncpa [#allocation7], 1
    %s1497 = scalar_lea.sflag [#allocation7], 1
    %1498 = vsyncpa %s1497, 1
    %1499 = vsyncpa [#allocation10], 1
    %1500 = vsyncpa [#allocation13], 1
    %1501 = vsyncpa [#allocation16], 1
    %1502 = vsyncpa [#allocation19], 1
    %1503 = vsyncpa [#allocation5], 1
    %s1504 = scalar_lea.sflag [#allocation5], 1
    %1505 = vsyncpa %s1504, 1

</llo_original>
